<compile_context>
chip_gen: v7x
topology: tpu7x:2x2x1
jax: 0.10.0
libtpu: 0.0.40
codegen_flags: <defaults>
</compile_context>

<pallas_src>
import functools

import numpy as np
import jax
import jax.numpy as jnp
from jax.experimental import pallas as pl
from jax.experimental.pallas import tpu as pltpu


def _round_up(v, m):
    return (v + m - 1) // m * m


def _sinusoid_kernel(x_ref, c_ref, o_ref):
    # x_ref: (Pc, tm)       Pc packed-position slots, lane-dense along tm
    # c_ref: (Pc + 8, PDp)  rows [0, Pc): masked band table; row Pc: phase (0 / pi/2)
    # o_ref: (tm, PDp)      lane-dense interleaved sin/cos encoding
    pc = x_ref.shape[0]
    band = c_ref[:pc, :]                     # (Pc, PDp) masked band rows
    phase = c_ref[pc:pc + 1, :]              # (1, PDp)  +pi/2 on odd lanes
    # ang[r, c] = sum_p x[p, r] * band[p, c]  -> MXU; VALU stays free for sin.
    ang = jax.lax.dot_general(
        x_ref[...], band,
        dimension_numbers=(((0,), (0,)), ((), ())),
        preferred_element_type=jnp.float32)
    o_ref[...] = jnp.sin(ang + phase)        # cos(z) == sin(z + pi/2) via phase row


@functools.partial(jax.jit, static_argnames=("angle_cycle", "d_hid", "tm"))
def sinusoid_encode(x, angle_cycle=1000, d_hid=32, tm=8192):
    """x: (B, S) float -> (B, S, d_hid) float32 sinusoid position encoding."""
    B, S = x.shape
    D = int(d_hid)
    assert D % 2 == 0, "d_hid must be even"
    N = B * S

    # Pack P consecutive positions per 128-lane output row when d_hid divides 128;
    # otherwise one position per row with the lane dim padded to a multiple of 128.
    P = 128 // D if (D < 128 and 128 % D == 0) else 1
    PD = P * D
    PDp = _round_up(PD, 128)                 # lane-dense output width
    Pc = _round_up(P, 8)                     # sublane-aligned contraction depth

    # Row tile: multiple of 128 (lane-dense x block, aligned out sublanes), sized to
    # keep double-buffered in+out tiles under ~12 MiB (v5e 16 MiB scoped default,
    # v7x 32 MiB), and capped so the grid has >=2 steps when possible (v7x 2 TCs).
    Nr = pl.cdiv(N, P)                            # packed rows needed
    vmem_budget = 12 * 1024 * 1024
    bytes_per_row = 2 * 4 * (PDp + Pc)            # double-buffered out + in, f32
    tm_budget = max(128, (vmem_budget // bytes_per_row) // 128 * 128)
    tm_eff = max(128, min(int(tm), tm_budget) // 128 * 128)
    tm_eff = min(tm_eff, max(128, _round_up(pl.cdiv(Nr, 2), 128)))
    Nr_pad = _round_up(Nr, tm_eff)                # no partial edge blocks
    grid = (Nr_pad // tm_eff,)
    Np = Nr_pad * P

    # Transposed / packed positions: x_t[p, r] = x[r*P + p]  (lane-dense along r).
    x_flat = x.reshape(-1).astype(jnp.float32)
    if Np > N:
        x_flat = jnp.pad(x_flat, (0, Np - N))
    x_t = x_flat.reshape(Nr_pad, P).T
    if Pc > P:
        x_t = jnp.pad(x_t, ((0, Pc - P), (0, 0)))

    # Constant table (trace-time numpy -> folded into the executable under jit).
    j = np.arange(D)
    band_exp = np.power(angle_cycle * 2.0 * np.pi,
                        (j // 2) * (-2.0 / D)).astype(np.float32)        # (D,)
    consts = np.zeros((Pc + 8, PDp), dtype=np.float32)
    for p in range(P):
        consts[p, p * D:(p + 1) * D] = band_exp                          # masked band rows
    consts[Pc, :PD] = (np.arange(PD) % 2) * (np.pi / 2.0)                # phase row
    consts = jnp.asarray(consts)

    out = pl.pallas_call(
        _sinusoid_kernel,
        out_shape=jax.ShapeDtypeStruct((Nr_pad, PDp), jnp.float32),
        grid_spec=pltpu.PrefetchScalarGridSpec(
            num_scalar_prefetch=0,
            grid=grid,
            in_specs=[
                pl.BlockSpec((Pc, tm_eff), lambda i: (0, i)),       # lane-dense x
                pl.BlockSpec((Pc + 8, PDp), lambda i: (0, 0)),      # const table
            ],
            out_specs=pl.BlockSpec((tm_eff, PDp), lambda i: (i, 0)),
        ),
        compiler_params=pltpu.CompilerParams(
            dimension_semantics=("parallel",)),
    )(x_t, consts)

    # Padded lanes / rows sliced off here; under jit this fuses with the reshape.
    if PDp != PD:
        out = out[:, :PD]
    enc = out.reshape(Nr_pad * P, D)
    if Np != N:
        enc = enc[:N]
    return enc.reshape(B, S, D)


def _reference(x, angle_cycle=1000, d_hid=32):
    k = np.arange(0, d_hid // 2) * (-2.0 / d_hid)
    band = np.power(angle_cycle * 2.0 * np.pi, k).astype(np.float32)   # (D//2,)
    ang = x[..., None].astype(np.float32) * band                        # (B,S,D//2)
    vec = np.zeros(x.shape + (d_hid,), dtype=np.float32)
    vec[..., 0::2] = np.sin(ang)
    vec[..., 1::2] = np.cos(ang)
    return vec


if __name__ == "__main__":
    B, S, D = 2, 8, 32
    key = jax.random.PRNGKey(0)
    # Positions (e.g. timestamps / indices) — arbitrary floats work.
    x = jax.random.uniform(key, (B, S), dtype=jnp.float32, minval=0.0, maxval=100.0)

    out = sinusoid_encode(x, angle_cycle=1000, d_hid=D)
    out = jax.block_until_ready(out)

    ref = _reference(np.asarray(x), angle_cycle=1000, d_hid=D)
    # atol 1e-4 on O(1) sin/cos values: covers the few-ULP angle rounding from the
    # MXU f32 contraction and the cos->sin(+pi/2) fold at |x*band| ~ 100.
    np.testing.assert_allclose(np.asarray(out), ref, rtol=1e-5, atol=1e-4)

    print("KERNEL_OK")
</pallas_src>

<mosaic_0001>
module attributes {stable_mosaic.version = 11 : i64} {
  func.func @_sinusoid_kernel(%arg0: i32, %arg1: memref<8x128xf32, #tpu.memory_space<vmem>>, %arg2: memref<16x128xf32, #tpu.memory_space<vmem>>, %arg3: memref<128x128xf32, #tpu.memory_space<vmem>>) attributes {dimension_semantics = [#tpu.dimension_semantics<parallel>], iteration_bounds = array<i64: 1>, scalar_prefetch = 0 : i64, scratch_operands = 0 : i64, tpu.core_type = #tpu.core_type<tc>, window_params = [{transform_indices = @transform_0, window_bounds = array<i64: 8, 128>}, {pipeline_mode = #tpu.pipeline_mode<synchronous>, transform_indices = @transform_1, window_bounds = array<i64: 16, 128>}, {transform_indices = @transform_2, window_bounds = array<i64: 128, 128>}]} {
    %c0 = arith.constant 0 : index
    %c0_0 = arith.constant 0 : index
    %0 = vector.load %arg2[%c0, %c0_0] : memref<16x128xf32, #tpu.memory_space<vmem>>, vector<8x128xf32>
    %c8 = arith.constant 8 : index
    %c0_1 = arith.constant 0 : index
    %1 = vector.load %arg2[%c8, %c0_1] : memref<16x128xf32, #tpu.memory_space<vmem>>, vector<1x128xf32>
    %c0_2 = arith.constant 0 : index
    %c0_3 = arith.constant 0 : index
    %2 = vector.load %arg1[%c0_2, %c0_3] : memref<8x128xf32, #tpu.memory_space<vmem>>, vector<8x128xf32>
    %cst = arith.constant dense<0.000000e+00> : vector<128x128xf32>
    %3 = tpu.matmul %2, %0, %cst {dimension_numbers = #tpu.dot_dimension_numbers<[0], [0], [1], [1], [0, 1, 1, 1], [], []>} : vector<8x128xf32>, vector<8x128xf32>, vector<128x128xf32> -> vector<128x128xf32>
    %4 = vector.broadcast %1 : vector<1x128xf32> to vector<128x128xf32>
    %5 = arith.addf %3, %4 : vector<128x128xf32>
    %6 = math.sin %5 : vector<128x128xf32>
    %c0_4 = arith.constant 0 : index
    %c0_5 = arith.constant 0 : index
    %7 = vector.load %arg3[%c0_4, %c0_5] : memref<128x128xf32, #tpu.memory_space<vmem>>, vector<128x128xf32>
    tpu.vector_store %arg3[%c0_4, %c0_5], %6 {strides = array<i32>} : memref<128x128xf32, #tpu.memory_space<vmem>>, vector<128x128xf32>,
    return
  }
  func.func @transform_0(%arg0: i32) -> (i32, i32) {
    %c0_i32 = arith.constant 0 : i32
    %c0_i32_0 = arith.constant 0 : i32
    return %c0_i32, %arg0 : i32, i32
  }
  func.func @transform_1(%arg0: i32) -> (i32, i32) {
    %c0_i32 = arith.constant 0 : i32
    %c0_i32_0 = arith.constant 0 : i32
    %c0_i32_1 = arith.constant 0 : i32
    return %c0_i32, %c0_i32_0 : i32, i32
  }
  func.func @transform_2(%arg0: i32) -> (i32, i32) {
    %c0_i32 = arith.constant 0 : i32
    %c0_i32_0 = arith.constant 0 : i32
    return %arg0, %c0_i32 : i32, i32
  }
}

</mosaic_0001>

<llo_original>
// kernel: sinusoid_encode.1
$region0: #{sinusoid_encode.1}
  #allocation0 [shape = 'u32[]', space=smem, size = 0x4, offset = 0x4, fixed_abs, tag = 'smem constant byte address 0x4 - core index']
  #allocation1 [shape = 'u32[144,128]{1,0:T(1,128)}', space=vmem, size = 0x12000, scoped, tag = 'internal scratch']
  %s0 = inlined_call_operand.vmem [shape: f32[8,128], index: 0, kind: input, shape index: {}]
  %s1 = inlined_call_operand.vmem [shape: f32[16,128], index: 1, kind: input, shape index: {}]
  %s2 = inlined_call_operand.vmem [shape: f32[128,128], index: 2, kind: output, shape index: {}]
  %s3 = sld [smem:[#allocation0]]
  $region18: #{sinusoid_encode.1} parent=0
    _
  %s5 = ssub.s32 1, %s3
  %s6 = scalar_select 0, %s5, %s3
  // Predicated region
  $region2: #{sinusoid_encode.1} parent=0 // pred_check
    _
  $region3: #{sinusoid_encode.1} parent=0 // pred_check_branch
    %8 = sbr.rel (0) target = $region5
  $region4: #{sinusoid_encode.1} parent=0 // pred_region
    _
  $region5: #{sinusoid_encode.1} parent=0 // pred_fallthru
    _
  // Predicated region
  $region6: #{sinusoid_encode.1} parent=0 // pred_check
    _
  $region7: #{sinusoid_encode.1} parent=0 // pred_check_branch
    %10 = sbr.rel (0) target = $region9
  $region8: #{sinusoid_encode.1} parent=0 // pred_region
    _
  $region9: #{sinusoid_encode.1} parent=0 // pred_fallthru
    _
  %v11 = vld [vmem:[%s1] sm:$0xff]
  %v12 = vld [vmem:[%s1 + $0x8] sm:$0x1]
  %v13 = vld [vmem:[%s0] sm:$0xff]
  %v14 = vlaneseq
  %v15 = vshrl.u32 %v14, 7
  %v16 = vsub.s32 0, %v15
  %v17 = vrot.slane %v12, %v16
  %18 = vxpose.xlu0.b32.start [1/16] %v13, 128
  %19 = vxpose.xlu0.b32.cont [2/16] 0.0, 128
  %20 = vxpose.xlu0.b32.cont [3/16] 0.0, 128
  %21 = vxpose.xlu0.b32.cont [4/16] 0.0, 128
  %22 = vxpose.xlu0.b32.cont [5/16] 0.0, 128
  %23 = vxpose.xlu0.b32.cont [6/16] 0.0, 128
  %24 = vxpose.xlu0.b32.cont [7/16] 0.0, 128
  %25 = vxpose.xlu0.b32.cont [8/16] 0.0, 128
  %26 = vxpose.xlu0.b32.cont [9/16] 0.0, 128
  %27 = vxpose.xlu0.b32.cont [10/16] 0.0, 128
  %28 = vxpose.xlu0.b32.cont [11/16] 0.0, 128
  %29 = vxpose.xlu0.b32.cont [12/16] 0.0, 128
  %30 = vxpose.xlu0.b32.cont [13/16] 0.0, 128
  %31 = vxpose.xlu0.b32.cont [14/16] 0.0, 128
  %32 = vxpose.xlu0.b32.cont [15/16] 0.0, 128
  %33 = vxpose.xlu0.b32.end [16/16] 0.0, 128
  %v34 = vpop.trf.xlu0
  %v35 = vpop.trf.xlu0
  %v36 = vpop.trf.xlu0
  %v37 = vpop.trf.xlu0
  %v38 = vpop.trf.xlu0
  %v39 = vpop.trf.xlu0
  %v40 = vpop.trf.xlu0
  %v41 = vpop.trf.xlu0
  %v42 = vpop.trf.xlu0
  %v43 = vpop.trf.xlu0
  %v44 = vpop.trf.xlu0
  %v45 = vpop.trf.xlu0
  %v46 = vpop.trf.xlu0
  %v47 = vpop.trf.xlu0
  %v48 = vpop.trf.xlu0
  %v49 = vpop.trf.xlu0
  %vm50 = vcmask 64512
  %v52 = vsel %vm50, %v34, 0
  %v55 = vsel %vm50, %v35, 0
  %v58 = vsel %vm50, %v36, 0
  %v61 = vsel %vm50, %v37, 0
  %v64 = vsel %vm50, %v38, 0
  %v67 = vsel %vm50, %v39, 0
  %v70 = vsel %vm50, %v40, 0
  %v73 = vsel %vm50, %v41, 0
  %v76 = vsel %vm50, %v42, 0
  %v79 = vsel %vm50, %v43, 0
  %v82 = vsel %vm50, %v44, 0
  %v85 = vsel %vm50, %v45, 0
  %v88 = vsel %vm50, %v46, 0
  %v91 = vsel %vm50, %v47, 0
  %v94 = vsel %vm50, %v48, 0
  %v97 = vsel %vm50, %v49, 0
  %99 = vmatprep.subr.mxu0 0.0
  %100 = vmatpush1.msra.mxu0 %v11
  %101 = vmatprep.subr.mxu0 0.0
  %102 = vmatpush1.msra.mxu0 0.0
  %103 = vmatprep.subr.mxu0 0.0
  %104 = vmatpush1.msra.mxu0 0.0
  %105 = vmatprep.subr.mxu0 0.0
  %106 = vmatpush1.msra.mxu0 0.0
  %107 = vmatprep.subr.mxu0 0.0
  %108 = vmatpush1.msra.mxu0 0.0
  %109 = vmatprep.subr.mxu0 0.0
  %110 = vmatpush1.msra.mxu0 0.0
  %111 = vmatprep.subr.mxu0 0.0
  %112 = vmatpush1.msra.mxu0 0.0
  %113 = vmatprep.subr.mxu0 0.0
  %114 = vmatpush1.msra.mxu0 0.0
  %115 = vmatprep.subr.mxu0 0.0
  %116 = vmatpush1.msra.mxu0 0.0
  %117 = vmatprep.subr.mxu0 0.0
  %118 = vmatpush1.msra.mxu0 0.0
  %119 = vmatprep.subr.mxu0 0.0
  %120 = vmatpush1.msra.mxu0 0.0
  %121 = vmatprep.subr.mxu0 0.0
  %122 = vmatpush1.msra.mxu0 0.0
  %123 = vmatprep.subr.mxu0 0.0
  %124 = vmatpush1.msra.mxu0 0.0
  %125 = vmatprep.subr.mxu0 0.0
  %126 = vmatpush1.msra.mxu0 0.0
  %127 = vmatprep.subr.mxu0 0.0
  %128 = vmatpush1.msra.mxu0 0.0
  %129 = vmatprep.subr.mxu0 0.0
  %130 = vmatpush1.msra.mxu0 0.0
  %131 = vmatprep.subr.mxu0 0.0
  %132 = vmatpush1.msra.mxu0 0.0
  %133 = vmatprep.subr.mxu0 0.0
  %134 = vmatpush1.msra.mxu0 0.0
  %135 = vmatprep.subr.mxu0 0.0
  %136 = vmatpush1.msra.mxu0 0.0
  %137 = vmatprep.subr.mxu0 0.0
  %138 = vmatpush1.msra.mxu0 0.0
  %139 = vmatprep.subr.mxu0 0.0
  %140 = vmatpush1.msra.mxu0 0.0
  %141 = vmatprep.subr.mxu0 0.0
  %142 = vmatpush1.msra.mxu0 0.0
  %143 = vmatprep.subr.mxu0 0.0
  %144 = vmatpush1.msra.mxu0 0.0
  %145 = vmatprep.subr.mxu0 0.0
  %146 = vmatpush1.msra.mxu0 0.0
  %147 = vmatprep.subr.mxu0 0.0
  %148 = vmatpush1.msra.mxu0 0.0
  %149 = vmatprep.subr.mxu0 0.0
  %150 = vmatpush1.msra.mxu0 0.0
  %151 = vmatprep.subr.mxu0 0.0
  %152 = vmatpush1.msra.mxu0 0.0
  %153 = vmatprep.subr.mxu0 0.0
  %154 = vmatpush1.msra.mxu0 0.0
  %155 = vmatprep.subr.mxu0 0.0
  %156 = vmatpush1.msra.mxu0 0.0
  %157 = vmatprep.subr.mxu0 0.0
  %158 = vmatpush1.msra.mxu0 0.0
  %159 = vmatprep.subr.mxu0 0.0
  %160 = vmatpush1.msra.mxu0 0.0
  %161 = vmatprep.subr.mxu0 0.0
  %162 = vmatpush1.msra.mxu0 0.0
  %163 = vmatprep.mubr.f32.mxu0 0.0
  %164 = vmatmul.mubr.f32.gmra.mrb[0].mxu0 %v52
  %v165 = vpop.f32.mrb[0].mxu0
  %v166 = vadd.f32 %v17, %v165
  %v167 = vpop.f32.mrb[0].mxu0
  %168 = vmatprep.mubr.f32.mxu0 0.0
  %169 = vmatmul.mubr.f32.gmra.mrb[0].mxu0 %v55
  %v170 = vpop.f32.mrb[0].mxu0
  %v171 = vadd.f32 %v17, %v170
  %v172 = vpop.f32.mrb[0].mxu0
  %173 = vmatprep.mubr.f32.mxu0 0.0
  %174 = vmatmul.mubr.f32.gmra.mrb[0].mxu0 %v58
  %v175 = vpop.f32.mrb[0].mxu0
  %v176 = vadd.f32 %v17, %v175
  %v177 = vpop.f32.mrb[0].mxu0
  %178 = vmatprep.mubr.f32.mxu0 0.0
  %179 = vmatmul.mubr.f32.gmra.mrb[0].mxu0 %v61
  %v180 = vpop.f32.mrb[0].mxu0
  %v181 = vadd.f32 %v17, %v180
  %v182 = vpop.f32.mrb[0].mxu0
  %183 = vmatprep.mubr.f32.mxu0 0.0
  %184 = vmatmul.mubr.f32.gmra.mrb[0].mxu0 %v64
  %v185 = vpop.f32.mrb[0].mxu0
  %v186 = vadd.f32 %v17, %v185
  %v187 = vpop.f32.mrb[0].mxu0
  %188 = vmatprep.mubr.f32.mxu0 0.0
  %189 = vmatmul.mubr.f32.gmra.mrb[0].mxu0 %v67
  %v190 = vpop.f32.mrb[0].mxu0
  %v191 = vadd.f32 %v17, %v190
  %v192 = vpop.f32.mrb[0].mxu0
  %193 = vmatprep.mubr.f32.mxu0 0.0
  %194 = vmatmul.mubr.f32.gmra.mrb[0].mxu0 %v70
  %v195 = vpop.f32.mrb[0].mxu0
  %v196 = vadd.f32 %v17, %v195
  %v197 = vpop.f32.mrb[0].mxu0
  %198 = vmatprep.mubr.f32.mxu0 0.0
  %199 = vmatmul.mubr.f32.gmra.mrb[0].mxu0 %v73
  %v200 = vpop.f32.mrb[0].mxu0
  %v201 = vadd.f32 %v17, %v200
  %v202 = vpop.f32.mrb[0].mxu0
  %203 = vmatprep.mubr.f32.mxu0 0.0
  %204 = vmatmul.mubr.f32.gmra.mrb[0].mxu0 %v76
  %v205 = vpop.f32.mrb[0].mxu0
  %v206 = vadd.f32 %v17, %v205
  %v207 = vpop.f32.mrb[0].mxu0
  %208 = vmatprep.mubr.f32.mxu0 0.0
  %209 = vmatmul.mubr.f32.gmra.mrb[0].mxu0 %v79
  %v210 = vpop.f32.mrb[0].mxu0
  %v211 = vadd.f32 %v17, %v210
  %v212 = vpop.f32.mrb[0].mxu0
  %213 = vmatprep.mubr.f32.mxu0 0.0
  %214 = vmatmul.mubr.f32.gmra.mrb[0].mxu0 %v82
  %v215 = vpop.f32.mrb[0].mxu0
  %v216 = vadd.f32 %v17, %v215
  %v217 = vpop.f32.mrb[0].mxu0
  %218 = vmatprep.mubr.f32.mxu0 0.0
  %219 = vmatmul.mubr.f32.gmra.mrb[0].mxu0 %v85
  %v220 = vpop.f32.mrb[0].mxu0
  %v221 = vadd.f32 %v17, %v220
  %v222 = vpop.f32.mrb[0].mxu0
  %223 = vmatprep.mubr.f32.mxu0 0.0
  %224 = vmatmul.mubr.f32.gmra.mrb[0].mxu0 %v88
  %v225 = vpop.f32.mrb[0].mxu0
  %v226 = vadd.f32 %v17, %v225
  %v227 = vpop.f32.mrb[0].mxu0
  %228 = vmatprep.mubr.f32.mxu0 0.0
  %229 = vmatmul.mubr.f32.gmra.mrb[0].mxu0 %v91
  %v230 = vpop.f32.mrb[0].mxu0
  %v231 = vadd.f32 %v17, %v230
  %v232 = vpop.f32.mrb[0].mxu0
  %233 = vmatprep.mubr.f32.mxu0 0.0
  %234 = vmatmul.mubr.f32.gmra.mrb[0].mxu0 %v94
  %v235 = vpop.f32.mrb[0].mxu0
  %v236 = vadd.f32 %v17, %v235
  %v237 = vpop.f32.mrb[0].mxu0
  %238 = vmatprep.mubr.f32.mxu0 0.0
  %239 = vmatmul.mubr.f32.gmra.mrb[0].mxu0 %v97
  %v240 = vpop.f32.mrb[0].mxu0
  %v241 = vadd.f32 %v17, %v240
  %v242 = vpop.f32.mrb[0].mxu0
  %243 = vdwg.mxu0
  %v244 = vand.u32 2147483647, %v166
  %vm245 = vcmp.le.f32.partialorder %v244, 0.7853982
  %vm246 = vcmp.lt.s32.totalorder %v166, 0
  %v247 = vand.u32 %v166, 2139095040
  %v248 = vshrl.u32 %v247, 23
  %v249 = vsub.s32 %v248, 127
  %v250 = vand.u32 2147483647, %v166
  %v251 = vand.u32 %v250, 8388607
  %v252 = vor.u32 %v251, 8388608
  %v253 = vsub.s32 0, %v252
  %v254 = vadd.s32 %v249, 1
  %vm255 = vcmp.gt.s32.totalorder %v254, 0
  %v256 = vsel %vm255, %v254, 0
  %v257 = vshrl.u32 %v256, 5
  %v258 = vand.u32 %v256, 31
  %v259 = vsub.s32 32, %v258
  %v260 = vshrl.u32 683565275, %v259
  %v261 = vshll.u32 683565275, %v258
  %v262 = vshrl.u32 2475754826, %v259
  %v263 = vor.u32 %v261, %v262
  %v264 = vshll.u32 2475754826, %v258
  %v265 = vshrl.u32 2131351028, %v259
  %v266 = vor.u32 %v264, %v265
  %v267 = vshll.u32 2131351028, %v258
  %v268 = vshrl.u32 2102212464, %v259
  %v269 = vor.u32 %v267, %v268
  %v270 = vshll.u32 2102212464, %v258
  %v271 = vshrl.u32 920167782, %v259
  %v272 = vor.u32 %v270, %v271
  %v273 = vshll.u32 920167782, %v258
  %v274 = vshrl.u32 1326507024, %v259
  %v275 = vor.u32 %v273, %v274
  %vm276 = vcmp.lt.s32.totalorder %v257, 1
  %vm277 = vcmp.lt.s32.totalorder %v257, 2
  %vm278 = vcmp.lt.s32.totalorder %v257, 3
  %vm279 = vcmp.lt.s32.totalorder %v257, 4
  %v280 = vsel %vm276, %v260, %v263
  %v281 = vsel %vm279, %v269, 2102212464
  %v282 = vsel %vm278, %v266, %v281
  %v283 = vsel %vm277, %v280, %v282
  %v284 = vsel %vm276, %v263, %v266
  %v285 = vsel %vm279, %v272, 920167782
  %v286 = vsel %vm278, %v269, %v285
  %v287 = vsel %vm277, %v284, %v286
  %v288 = vsel %vm276, %v266, %v269
  %v289 = vsel %vm279, %v275, 1326507024
  %v290 = vsel %vm278, %v272, %v289
  %v291 = vsel %vm277, %v288, %v290
  %v292 = vshll.u32 %v252, 8
  %v293 = vmul.u32.u64.compose %v292, %v291
  %v294 = vextract.low.u32 %v293
  %v295 = vextract.high.u32 %v293
  %v296 = vmul.u32.u64.compose %v292, %v287
  %v297 = vextract.low.u32 %v296
  %v298 = vextract.high.u32 %v296
  %v299 = vmul.u32 %v292, %v283
  %v300 = vadd.s32 %v295, %v297
  %vm301 = vc.u32 %v295, %v297
  %v302 = vadd.s32 %v298, 1
  %v303 = vsel %vm301, %v302, %v298
  %v304 = vadd.s32 %v299, %v303
  %v305 = vadd.s32 %v304, 536870912
  %v306 = vshrl.u32 %v305, 30
  %v307 = vshll.u32 %v306, 30
  %v308 = vsub.s32 %v304, %v307
  %vm309 = vcmp.lt.s32.totalorder %v308, 0
  %v310 = vsub.s32 0, %v308
  %v311 = vsel %vm309, %v310, %v308
  %v312 = vclz %v311
  %v313 = vsub.s32 %v312, 2
  %vm314 = vcmp.gt.s32.totalorder 0, %v313
  %v315 = vsel %vm314, 0, %v313
  %v316 = vsub.s32 32, %v315
  %v317 = vshll.u32 %v308, %v315
  %v318 = vshrl.u32 %v300, %v316
  %v319 = vor.u32 %v317, %v318
  %v320 = vsub.s32 4294967266, %v315
  %v321 = vadd.s32 %v320, 127
  %v322 = vshll.u32 %v321, 23
  %v323 = vor.u32 4788187, %v322
  %v324 = vand.u32 2147483647, %v323
  %v326 = vcvt.s32.f32 %v319
  %v327 = vmul.f32 %v326, %v324
  %v328 = vxor.u32 %v327, 2147483648
  %v329 = vsel %vm246, %v328, %v327
  %v330 = vsub.s32 4, %v306
  %v331 = vsel %vm246, %v330, %v306
  %v332 = vsel %vm245, %v166, %v329
  %v333 = vsel %vm245, 0, %v331
  %v334 = vcosq.f32.pop %v332
  %v335 = vsinq.f32.pop %v332
  %vm336 = vweird.f32 %v166
  %v337 = vadd.s32 %v333, 3
  %v338 = vand.u32 %v337, 3
  %vm339 = vcmp.lt.s32.totalorder %v338, 2
  %vm340 = vcmp.eq.s32.totalorder %v338, 0
  %v341 = vxor.u32 %v335, 2147483648
  %v342 = vsel %vm340, %v334, %v341
  %vm343 = vcmp.eq.s32.totalorder %v338, 2
  %v344 = vxor.u32 %v334, 2147483648
  %v345 = vsel %vm343, %v344, %v335
  %v346 = vsel %vm339, %v342, %v345
  %v347 = vsel %vm336, nan, %v346
  %v348 = vand.u32 2147483647, %v171
  %vm349 = vcmp.le.f32.partialorder %v348, 0.7853982
  %vm350 = vcmp.lt.s32.totalorder %v171, 0
  %v351 = vand.u32 %v171, 2139095040
  %v352 = vshrl.u32 %v351, 23
  %v353 = vsub.s32 %v352, 127
  %v354 = vand.u32 2147483647, %v171
  %v355 = vand.u32 %v354, 8388607
  %v356 = vor.u32 %v355, 8388608
  %v357 = vsub.s32 0, %v356
  %v358 = vadd.s32 %v353, 1
  %vm359 = vcmp.gt.s32.totalorder %v358, 0
  %v360 = vsel %vm359, %v358, 0
  %v361 = vshrl.u32 %v360, 5
  %v362 = vand.u32 %v360, 31
  %v363 = vsub.s32 32, %v362
  %v364 = vshrl.u32 683565275, %v363
  %v365 = vshll.u32 683565275, %v362
  %v366 = vshrl.u32 2475754826, %v363
  %v367 = vor.u32 %v365, %v366
  %v368 = vshll.u32 2475754826, %v362
  %v369 = vshrl.u32 2131351028, %v363
  %v370 = vor.u32 %v368, %v369
  %v371 = vshll.u32 2131351028, %v362
  %v372 = vshrl.u32 2102212464, %v363
  %v373 = vor.u32 %v371, %v372
  %v374 = vshll.u32 2102212464, %v362
  %v375 = vshrl.u32 920167782, %v363
  %v376 = vor.u32 %v374, %v375
  %v377 = vshll.u32 920167782, %v362
  %v378 = vshrl.u32 1326507024, %v363
  %v379 = vor.u32 %v377, %v378
  %vm380 = vcmp.lt.s32.totalorder %v361, 1
  %vm381 = vcmp.lt.s32.totalorder %v361, 2
  %vm382 = vcmp.lt.s32.totalorder %v361, 3
  %vm383 = vcmp.lt.s32.totalorder %v361, 4
  %v384 = vsel %vm380, %v364, %v367
  %v385 = vsel %vm383, %v373, 2102212464
  %v386 = vsel %vm382, %v370, %v385
  %v387 = vsel %vm381, %v384, %v386
  %v388 = vsel %vm380, %v367, %v370
  %v389 = vsel %vm383, %v376, 920167782
  %v390 = vsel %vm382, %v373, %v389
  %v391 = vsel %vm381, %v388, %v390
  %v392 = vsel %vm380, %v370, %v373
  %v393 = vsel %vm383, %v379, 1326507024
  %v394 = vsel %vm382, %v376, %v393
  %v395 = vsel %vm381, %v392, %v394
  %v396 = vshll.u32 %v356, 8
  %v397 = vmul.u32.u64.compose %v396, %v395
  %v398 = vextract.low.u32 %v397
  %v399 = vextract.high.u32 %v397
  %v400 = vmul.u32.u64.compose %v396, %v391
  %v401 = vextract.low.u32 %v400
  %v402 = vextract.high.u32 %v400
  %v403 = vmul.u32 %v396, %v387
  %v404 = vadd.s32 %v399, %v401
  %vm405 = vc.u32 %v399, %v401
  %v406 = vadd.s32 %v402, 1
  %v407 = vsel %vm405, %v406, %v402
  %v408 = vadd.s32 %v403, %v407
  %v409 = vadd.s32 %v408, 536870912
  %v410 = vshrl.u32 %v409, 30
  %v411 = vshll.u32 %v410, 30
  %v412 = vsub.s32 %v408, %v411
  %vm413 = vcmp.lt.s32.totalorder %v412, 0
  %v414 = vsub.s32 0, %v412
  %v415 = vsel %vm413, %v414, %v412
  %v416 = vclz %v415
  %v417 = vsub.s32 %v416, 2
  %vm418 = vcmp.gt.s32.totalorder 0, %v417
  %v419 = vsel %vm418, 0, %v417
  %v420 = vsub.s32 32, %v419
  %v421 = vshll.u32 %v412, %v419
  %v422 = vshrl.u32 %v404, %v420
  %v423 = vor.u32 %v421, %v422
  %v424 = vsub.s32 4294967266, %v419
  %v425 = vadd.s32 %v424, 127
  %v426 = vshll.u32 %v425, 23
  %v427 = vor.u32 4788187, %v426
  %v428 = vand.u32 2147483647, %v427
  %v430 = vcvt.s32.f32 %v423
  %v431 = vmul.f32 %v430, %v428
  %v432 = vxor.u32 %v431, 2147483648
  %v433 = vsel %vm350, %v432, %v431
  %v434 = vsub.s32 4, %v410
  %v435 = vsel %vm350, %v434, %v410
  %v436 = vsel %vm349, %v171, %v433
  %v437 = vsel %vm349, 0, %v435
  %v438 = vcosq.f32.pop %v436
  %v439 = vsinq.f32.pop %v436
  %vm440 = vweird.f32 %v171
  %v441 = vadd.s32 %v437, 3
  %v442 = vand.u32 %v441, 3
  %vm443 = vcmp.lt.s32.totalorder %v442, 2
  %vm444 = vcmp.eq.s32.totalorder %v442, 0
  %v445 = vxor.u32 %v439, 2147483648
  %v446 = vsel %vm444, %v438, %v445
  %vm447 = vcmp.eq.s32.totalorder %v442, 2
  %v448 = vxor.u32 %v438, 2147483648
  %v449 = vsel %vm447, %v448, %v439
  %v450 = vsel %vm443, %v446, %v449
  %v451 = vsel %vm440, nan, %v450
  %v452 = vand.u32 2147483647, %v176
  %vm453 = vcmp.le.f32.partialorder %v452, 0.7853982
  %vm454 = vcmp.lt.s32.totalorder %v176, 0
  %v455 = vand.u32 %v176, 2139095040
  %v456 = vshrl.u32 %v455, 23
  %v457 = vsub.s32 %v456, 127
  %v458 = vand.u32 2147483647, %v176
  %v459 = vand.u32 %v458, 8388607
  %v460 = vor.u32 %v459, 8388608
  %v461 = vsub.s32 0, %v460
  %v462 = vadd.s32 %v457, 1
  %vm463 = vcmp.gt.s32.totalorder %v462, 0
  %v464 = vsel %vm463, %v462, 0
  %v465 = vshrl.u32 %v464, 5
  %v466 = vand.u32 %v464, 31
  %v467 = vsub.s32 32, %v466
  %v468 = vshrl.u32 683565275, %v467
  %v469 = vshll.u32 683565275, %v466
  %v470 = vshrl.u32 2475754826, %v467
  %v471 = vor.u32 %v469, %v470
  %v472 = vshll.u32 2475754826, %v466
  %v473 = vshrl.u32 2131351028, %v467
  %v474 = vor.u32 %v472, %v473
  %v475 = vshll.u32 2131351028, %v466
  %v476 = vshrl.u32 2102212464, %v467
  %v477 = vor.u32 %v475, %v476
  %v478 = vshll.u32 2102212464, %v466
  %v479 = vshrl.u32 920167782, %v467
  %v480 = vor.u32 %v478, %v479
  %v481 = vshll.u32 920167782, %v466
  %v482 = vshrl.u32 1326507024, %v467
  %v483 = vor.u32 %v481, %v482
  %vm484 = vcmp.lt.s32.totalorder %v465, 1
  %vm485 = vcmp.lt.s32.totalorder %v465, 2
  %vm486 = vcmp.lt.s32.totalorder %v465, 3
  %vm487 = vcmp.lt.s32.totalorder %v465, 4
  %v488 = vsel %vm484, %v468, %v471
  %v489 = vsel %vm487, %v477, 2102212464
  %v490 = vsel %vm486, %v474, %v489
  %v491 = vsel %vm485, %v488, %v490
  %v492 = vsel %vm484, %v471, %v474
  %v493 = vsel %vm487, %v480, 920167782
  %v494 = vsel %vm486, %v477, %v493
  %v495 = vsel %vm485, %v492, %v494
  %v496 = vsel %vm484, %v474, %v477
  %v497 = vsel %vm487, %v483, 1326507024
  %v498 = vsel %vm486, %v480, %v497
  %v499 = vsel %vm485, %v496, %v498
  %v500 = vshll.u32 %v460, 8
  %v501 = vmul.u32.u64.compose %v500, %v499
  %v502 = vextract.low.u32 %v501
  %v503 = vextract.high.u32 %v501
  %v504 = vmul.u32.u64.compose %v500, %v495
  %v505 = vextract.low.u32 %v504
  %v506 = vextract.high.u32 %v504
  %v507 = vmul.u32 %v500, %v491
  %v508 = vadd.s32 %v503, %v505
  %vm509 = vc.u32 %v503, %v505
  %v510 = vadd.s32 %v506, 1
  %v511 = vsel %vm509, %v510, %v506
  %v512 = vadd.s32 %v507, %v511
  %v513 = vadd.s32 %v512, 536870912
  %v514 = vshrl.u32 %v513, 30
  %v515 = vshll.u32 %v514, 30
  %v516 = vsub.s32 %v512, %v515
  %vm517 = vcmp.lt.s32.totalorder %v516, 0
  %v518 = vsub.s32 0, %v516
  %v519 = vsel %vm517, %v518, %v516
  %v520 = vclz %v519
  %v521 = vsub.s32 %v520, 2
  %vm522 = vcmp.gt.s32.totalorder 0, %v521
  %v523 = vsel %vm522, 0, %v521
  %v524 = vsub.s32 32, %v523
  %v525 = vshll.u32 %v516, %v523
  %v526 = vshrl.u32 %v508, %v524
  %v527 = vor.u32 %v525, %v526
  %v528 = vsub.s32 4294967266, %v523
  %v529 = vadd.s32 %v528, 127
  %v530 = vshll.u32 %v529, 23
  %v531 = vor.u32 4788187, %v530
  %v532 = vand.u32 2147483647, %v531
  %v534 = vcvt.s32.f32 %v527
  %v535 = vmul.f32 %v534, %v532
  %v536 = vxor.u32 %v535, 2147483648
  %v537 = vsel %vm454, %v536, %v535
  %v538 = vsub.s32 4, %v514
  %v539 = vsel %vm454, %v538, %v514
  %v540 = vsel %vm453, %v176, %v537
  %v541 = vsel %vm453, 0, %v539
  %v542 = vcosq.f32.pop %v540
  %v543 = vsinq.f32.pop %v540
  %vm544 = vweird.f32 %v176
  %v545 = vadd.s32 %v541, 3
  %v546 = vand.u32 %v545, 3
  %vm547 = vcmp.lt.s32.totalorder %v546, 2
  %vm548 = vcmp.eq.s32.totalorder %v546, 0
  %v549 = vxor.u32 %v543, 2147483648
  %v550 = vsel %vm548, %v542, %v549
  %vm551 = vcmp.eq.s32.totalorder %v546, 2
  %v552 = vxor.u32 %v542, 2147483648
  %v553 = vsel %vm551, %v552, %v543
  %v554 = vsel %vm547, %v550, %v553
  %v555 = vsel %vm544, nan, %v554
  %v556 = vand.u32 2147483647, %v181
  %vm557 = vcmp.le.f32.partialorder %v556, 0.7853982
  %vm558 = vcmp.lt.s32.totalorder %v181, 0
  %v559 = vand.u32 %v181, 2139095040
  %v560 = vshrl.u32 %v559, 23
  %v561 = vsub.s32 %v560, 127
  %v562 = vand.u32 2147483647, %v181
  %v563 = vand.u32 %v562, 8388607
  %v564 = vor.u32 %v563, 8388608
  %v565 = vsub.s32 0, %v564
  %v566 = vadd.s32 %v561, 1
  %vm567 = vcmp.gt.s32.totalorder %v566, 0
  %v568 = vsel %vm567, %v566, 0
  %v569 = vshrl.u32 %v568, 5
  %v570 = vand.u32 %v568, 31
  %v571 = vsub.s32 32, %v570
  %v572 = vshrl.u32 683565275, %v571
  %v573 = vshll.u32 683565275, %v570
  %v574 = vshrl.u32 2475754826, %v571
  %v575 = vor.u32 %v573, %v574
  %v576 = vshll.u32 2475754826, %v570
  %v577 = vshrl.u32 2131351028, %v571
  %v578 = vor.u32 %v576, %v577
  %v579 = vshll.u32 2131351028, %v570
  %v580 = vshrl.u32 2102212464, %v571
  %v581 = vor.u32 %v579, %v580
  %v582 = vshll.u32 2102212464, %v570
  %v583 = vshrl.u32 920167782, %v571
  %v584 = vor.u32 %v582, %v583
  %v585 = vshll.u32 920167782, %v570
  %v586 = vshrl.u32 1326507024, %v571
  %v587 = vor.u32 %v585, %v586
  %vm588 = vcmp.lt.s32.totalorder %v569, 1
  %vm589 = vcmp.lt.s32.totalorder %v569, 2
  %vm590 = vcmp.lt.s32.totalorder %v569, 3
  %vm591 = vcmp.lt.s32.totalorder %v569, 4
  %v592 = vsel %vm588, %v572, %v575
  %v593 = vsel %vm591, %v581, 2102212464
  %v594 = vsel %vm590, %v578, %v593
  %v595 = vsel %vm589, %v592, %v594
  %v596 = vsel %vm588, %v575, %v578
  %v597 = vsel %vm591, %v584, 920167782
  %v598 = vsel %vm590, %v581, %v597
  %v599 = vsel %vm589, %v596, %v598
  %v600 = vsel %vm588, %v578, %v581
  %v601 = vsel %vm591, %v587, 1326507024
  %v602 = vsel %vm590, %v584, %v601
  %v603 = vsel %vm589, %v600, %v602
  %v604 = vshll.u32 %v564, 8
  %v605 = vmul.u32.u64.compose %v604, %v603
  %v606 = vextract.low.u32 %v605
  %v607 = vextract.high.u32 %v605
  %v608 = vmul.u32.u64.compose %v604, %v599
  %v609 = vextract.low.u32 %v608
  %v610 = vextract.high.u32 %v608
  %v611 = vmul.u32 %v604, %v595
  %v612 = vadd.s32 %v607, %v609
  %vm613 = vc.u32 %v607, %v609
  %v614 = vadd.s32 %v610, 1
  %v615 = vsel %vm613, %v614, %v610
  %v616 = vadd.s32 %v611, %v615
  %v617 = vadd.s32 %v616, 536870912
  %v618 = vshrl.u32 %v617, 30
  %v619 = vshll.u32 %v618, 30
  %v620 = vsub.s32 %v616, %v619
  %vm621 = vcmp.lt.s32.totalorder %v620, 0
  %v622 = vsub.s32 0, %v620
  %v623 = vsel %vm621, %v622, %v620
  %v624 = vclz %v623
  %v625 = vsub.s32 %v624, 2
  %vm626 = vcmp.gt.s32.totalorder 0, %v625
  %v627 = vsel %vm626, 0, %v625
  %v628 = vsub.s32 32, %v627
  %v629 = vshll.u32 %v620, %v627
  %v630 = vshrl.u32 %v612, %v628
  %v631 = vor.u32 %v629, %v630
  %v632 = vsub.s32 4294967266, %v627
  %v633 = vadd.s32 %v632, 127
  %v634 = vshll.u32 %v633, 23
  %v635 = vor.u32 4788187, %v634
  %v636 = vand.u32 2147483647, %v635
  %v638 = vcvt.s32.f32 %v631
  %v639 = vmul.f32 %v638, %v636
  %v640 = vxor.u32 %v639, 2147483648
  %v641 = vsel %vm558, %v640, %v639
  %v642 = vsub.s32 4, %v618
  %v643 = vsel %vm558, %v642, %v618
  %v644 = vsel %vm557, %v181, %v641
  %v645 = vsel %vm557, 0, %v643
  %v646 = vcosq.f32.pop %v644
  %v647 = vsinq.f32.pop %v644
  %vm648 = vweird.f32 %v181
  %v649 = vadd.s32 %v645, 3
  %v650 = vand.u32 %v649, 3
  %vm651 = vcmp.lt.s32.totalorder %v650, 2
  %vm652 = vcmp.eq.s32.totalorder %v650, 0
  %v653 = vxor.u32 %v647, 2147483648
  %v654 = vsel %vm652, %v646, %v653
  %vm655 = vcmp.eq.s32.totalorder %v650, 2
  %v656 = vxor.u32 %v646, 2147483648
  %v657 = vsel %vm655, %v656, %v647
  %v658 = vsel %vm651, %v654, %v657
  %v659 = vsel %vm648, nan, %v658
  %v660 = vand.u32 2147483647, %v186
  %vm661 = vcmp.le.f32.partialorder %v660, 0.7853982
  %vm662 = vcmp.lt.s32.totalorder %v186, 0
  %v663 = vand.u32 %v186, 2139095040
  %v664 = vshrl.u32 %v663, 23
  %v665 = vsub.s32 %v664, 127
  %v666 = vand.u32 2147483647, %v186
  %v667 = vand.u32 %v666, 8388607
  %v668 = vor.u32 %v667, 8388608
  %v669 = vsub.s32 0, %v668
  %v670 = vadd.s32 %v665, 1
  %vm671 = vcmp.gt.s32.totalorder %v670, 0
  %v672 = vsel %vm671, %v670, 0
  %v673 = vshrl.u32 %v672, 5
  %v674 = vand.u32 %v672, 31
  %v675 = vsub.s32 32, %v674
  %v676 = vshrl.u32 683565275, %v675
  %v677 = vshll.u32 683565275, %v674
  %v678 = vshrl.u32 2475754826, %v675
  %v679 = vor.u32 %v677, %v678
  %v680 = vshll.u32 2475754826, %v674
  %v681 = vshrl.u32 2131351028, %v675
  %v682 = vor.u32 %v680, %v681
  %v683 = vshll.u32 2131351028, %v674
  %v684 = vshrl.u32 2102212464, %v675
  %v685 = vor.u32 %v683, %v684
  %v686 = vshll.u32 2102212464, %v674
  %v687 = vshrl.u32 920167782, %v675
  %v688 = vor.u32 %v686, %v687
  %v689 = vshll.u32 920167782, %v674
  %v690 = vshrl.u32 1326507024, %v675
  %v691 = vor.u32 %v689, %v690
  %vm692 = vcmp.lt.s32.totalorder %v673, 1
  %vm693 = vcmp.lt.s32.totalorder %v673, 2
  %vm694 = vcmp.lt.s32.totalorder %v673, 3
  %vm695 = vcmp.lt.s32.totalorder %v673, 4
  %v696 = vsel %vm692, %v676, %v679
  %v697 = vsel %vm695, %v685, 2102212464
  %v698 = vsel %vm694, %v682, %v697
  %v699 = vsel %vm693, %v696, %v698
  %v700 = vsel %vm692, %v679, %v682
  %v701 = vsel %vm695, %v688, 920167782
  %v702 = vsel %vm694, %v685, %v701
  %v703 = vsel %vm693, %v700, %v702
  %v704 = vsel %vm692, %v682, %v685
  %v705 = vsel %vm695, %v691, 1326507024
  %v706 = vsel %vm694, %v688, %v705
  %v707 = vsel %vm693, %v704, %v706
  %v708 = vshll.u32 %v668, 8
  %v709 = vmul.u32.u64.compose %v708, %v707
  %v710 = vextract.low.u32 %v709
  %v711 = vextract.high.u32 %v709
  %v712 = vmul.u32.u64.compose %v708, %v703
  %v713 = vextract.low.u32 %v712
  %v714 = vextract.high.u32 %v712
  %v715 = vmul.u32 %v708, %v699
  %v716 = vadd.s32 %v711, %v713
  %vm717 = vc.u32 %v711, %v713
  %v718 = vadd.s32 %v714, 1
  %v719 = vsel %vm717, %v718, %v714
  %v720 = vadd.s32 %v715, %v719
  %v721 = vadd.s32 %v720, 536870912
  %v722 = vshrl.u32 %v721, 30
  %v723 = vshll.u32 %v722, 30
  %v724 = vsub.s32 %v720, %v723
  %vm725 = vcmp.lt.s32.totalorder %v724, 0
  %v726 = vsub.s32 0, %v724
  %v727 = vsel %vm725, %v726, %v724
  %v728 = vclz %v727
  %v729 = vsub.s32 %v728, 2
  %vm730 = vcmp.gt.s32.totalorder 0, %v729
  %v731 = vsel %vm730, 0, %v729
  %v732 = vsub.s32 32, %v731
  %v733 = vshll.u32 %v724, %v731
  %v734 = vshrl.u32 %v716, %v732
  %v735 = vor.u32 %v733, %v734
  %v736 = vsub.s32 4294967266, %v731
  %v737 = vadd.s32 %v736, 127
  %v738 = vshll.u32 %v737, 23
  %v739 = vor.u32 4788187, %v738
  %v740 = vand.u32 2147483647, %v739
  %v742 = vcvt.s32.f32 %v735
  %v743 = vmul.f32 %v742, %v740
  %v744 = vxor.u32 %v743, 2147483648
  %v745 = vsel %vm662, %v744, %v743
  %v746 = vsub.s32 4, %v722
  %v747 = vsel %vm662, %v746, %v722
  %v748 = vsel %vm661, %v186, %v745
  %v749 = vsel %vm661, 0, %v747
  %v750 = vcosq.f32.pop %v748
  %v751 = vsinq.f32.pop %v748
  %vm752 = vweird.f32 %v186
  %v753 = vadd.s32 %v749, 3
  %v754 = vand.u32 %v753, 3
  %vm755 = vcmp.lt.s32.totalorder %v754, 2
  %vm756 = vcmp.eq.s32.totalorder %v754, 0
  %v757 = vxor.u32 %v751, 2147483648
  %v758 = vsel %vm756, %v750, %v757
  %vm759 = vcmp.eq.s32.totalorder %v754, 2
  %v760 = vxor.u32 %v750, 2147483648
  %v761 = vsel %vm759, %v760, %v751
  %v762 = vsel %vm755, %v758, %v761
  %v763 = vsel %vm752, nan, %v762
  %v764 = vand.u32 2147483647, %v191
  %vm765 = vcmp.le.f32.partialorder %v764, 0.7853982
  %vm766 = vcmp.lt.s32.totalorder %v191, 0
  %v767 = vand.u32 %v191, 2139095040
  %v768 = vshrl.u32 %v767, 23
  %v769 = vsub.s32 %v768, 127
  %v770 = vand.u32 2147483647, %v191
  %v771 = vand.u32 %v770, 8388607
  %v772 = vor.u32 %v771, 8388608
  %v773 = vsub.s32 0, %v772
  %v774 = vadd.s32 %v769, 1
  %vm775 = vcmp.gt.s32.totalorder %v774, 0
  %v776 = vsel %vm775, %v774, 0
  %v777 = vshrl.u32 %v776, 5
  %v778 = vand.u32 %v776, 31
  %v779 = vsub.s32 32, %v778
  %v780 = vshrl.u32 683565275, %v779
  %v781 = vshll.u32 683565275, %v778
  %v782 = vshrl.u32 2475754826, %v779
  %v783 = vor.u32 %v781, %v782
  %v784 = vshll.u32 2475754826, %v778
  %v785 = vshrl.u32 2131351028, %v779
  %v786 = vor.u32 %v784, %v785
  %v787 = vshll.u32 2131351028, %v778
  %v788 = vshrl.u32 2102212464, %v779
  %v789 = vor.u32 %v787, %v788
  %v790 = vshll.u32 2102212464, %v778
  %v791 = vshrl.u32 920167782, %v779
  %v792 = vor.u32 %v790, %v791
  %v793 = vshll.u32 920167782, %v778
  %v794 = vshrl.u32 1326507024, %v779
  %v795 = vor.u32 %v793, %v794
  %vm796 = vcmp.lt.s32.totalorder %v777, 1
  %vm797 = vcmp.lt.s32.totalorder %v777, 2
  %vm798 = vcmp.lt.s32.totalorder %v777, 3
  %vm799 = vcmp.lt.s32.totalorder %v777, 4
  %v800 = vsel %vm796, %v780, %v783
  %v801 = vsel %vm799, %v789, 2102212464
  %v802 = vsel %vm798, %v786, %v801
  %v803 = vsel %vm797, %v800, %v802
  %v804 = vsel %vm796, %v783, %v786
  %v805 = vsel %vm799, %v792, 920167782
  %v806 = vsel %vm798, %v789, %v805
  %v807 = vsel %vm797, %v804, %v806
  %v808 = vsel %vm796, %v786, %v789
  %v809 = vsel %vm799, %v795, 1326507024
  %v810 = vsel %vm798, %v792, %v809
  %v811 = vsel %vm797, %v808, %v810
  %v812 = vshll.u32 %v772, 8
  %v813 = vmul.u32.u64.compose %v812, %v811
  %v814 = vextract.low.u32 %v813
  %v815 = vextract.high.u32 %v813
  %v816 = vmul.u32.u64.compose %v812, %v807
  %v817 = vextract.low.u32 %v816
  %v818 = vextract.high.u32 %v816
  %v819 = vmul.u32 %v812, %v803
  %v820 = vadd.s32 %v815, %v817
  %vm821 = vc.u32 %v815, %v817
  %v822 = vadd.s32 %v818, 1
  %v823 = vsel %vm821, %v822, %v818
  %v824 = vadd.s32 %v819, %v823
  %v825 = vadd.s32 %v824, 536870912
  %v826 = vshrl.u32 %v825, 30
  %v827 = vshll.u32 %v826, 30
  %v828 = vsub.s32 %v824, %v827
  %vm829 = vcmp.lt.s32.totalorder %v828, 0
  %v830 = vsub.s32 0, %v828
  %v831 = vsel %vm829, %v830, %v828
  %v832 = vclz %v831
  %v833 = vsub.s32 %v832, 2
  %vm834 = vcmp.gt.s32.totalorder 0, %v833
  %v835 = vsel %vm834, 0, %v833
  %v836 = vsub.s32 32, %v835
  %v837 = vshll.u32 %v828, %v835
  %v838 = vshrl.u32 %v820, %v836
  %v839 = vor.u32 %v837, %v838
  %v840 = vsub.s32 4294967266, %v835
  %v841 = vadd.s32 %v840, 127
  %v842 = vshll.u32 %v841, 23
  %v843 = vor.u32 4788187, %v842
  %v844 = vand.u32 2147483647, %v843
  %v846 = vcvt.s32.f32 %v839
  %v847 = vmul.f32 %v846, %v844
  %v848 = vxor.u32 %v847, 2147483648
  %v849 = vsel %vm766, %v848, %v847
  %v850 = vsub.s32 4, %v826
  %v851 = vsel %vm766, %v850, %v826
  %v852 = vsel %vm765, %v191, %v849
  %v853 = vsel %vm765, 0, %v851
  %v854 = vcosq.f32.pop %v852
  %v855 = vsinq.f32.pop %v852
  %vm856 = vweird.f32 %v191
  %v857 = vadd.s32 %v853, 3
  %v858 = vand.u32 %v857, 3
  %vm859 = vcmp.lt.s32.totalorder %v858, 2
  %vm860 = vcmp.eq.s32.totalorder %v858, 0
  %v861 = vxor.u32 %v855, 2147483648
  %v862 = vsel %vm860, %v854, %v861
  %vm863 = vcmp.eq.s32.totalorder %v858, 2
  %v864 = vxor.u32 %v854, 2147483648
  %v865 = vsel %vm863, %v864, %v855
  %v866 = vsel %vm859, %v862, %v865
  %v867 = vsel %vm856, nan, %v866
  %v868 = vand.u32 2147483647, %v196
  %vm869 = vcmp.le.f32.partialorder %v868, 0.7853982
  %vm870 = vcmp.lt.s32.totalorder %v196, 0
  %v871 = vand.u32 %v196, 2139095040
  %v872 = vshrl.u32 %v871, 23
  %v873 = vsub.s32 %v872, 127
  %v874 = vand.u32 2147483647, %v196
  %v875 = vand.u32 %v874, 8388607
  %v876 = vor.u32 %v875, 8388608
  %v877 = vsub.s32 0, %v876
  %v878 = vadd.s32 %v873, 1
  %vm879 = vcmp.gt.s32.totalorder %v878, 0
  %v880 = vsel %vm879, %v878, 0
  %v881 = vshrl.u32 %v880, 5
  %v882 = vand.u32 %v880, 31
  %v883 = vsub.s32 32, %v882
  %v884 = vshrl.u32 683565275, %v883
  %v885 = vshll.u32 683565275, %v882
  %v886 = vshrl.u32 2475754826, %v883
  %v887 = vor.u32 %v885, %v886
  %v888 = vshll.u32 2475754826, %v882
  %v889 = vshrl.u32 2131351028, %v883
  %v890 = vor.u32 %v888, %v889
  %v891 = vshll.u32 2131351028, %v882
  %v892 = vshrl.u32 2102212464, %v883
  %v893 = vor.u32 %v891, %v892
  %v894 = vshll.u32 2102212464, %v882
  %v895 = vshrl.u32 920167782, %v883
  %v896 = vor.u32 %v894, %v895
  %v897 = vshll.u32 920167782, %v882
  %v898 = vshrl.u32 1326507024, %v883
  %v899 = vor.u32 %v897, %v898
  %vm900 = vcmp.lt.s32.totalorder %v881, 1
  %vm901 = vcmp.lt.s32.totalorder %v881, 2
  %vm902 = vcmp.lt.s32.totalorder %v881, 3
  %vm903 = vcmp.lt.s32.totalorder %v881, 4
  %v904 = vsel %vm900, %v884, %v887
  %v905 = vsel %vm903, %v893, 2102212464
  %v906 = vsel %vm902, %v890, %v905
  %v907 = vsel %vm901, %v904, %v906
  %v908 = vsel %vm900, %v887, %v890
  %v909 = vsel %vm903, %v896, 920167782
  %v910 = vsel %vm902, %v893, %v909
  %v911 = vsel %vm901, %v908, %v910
  %v912 = vsel %vm900, %v890, %v893
  %v913 = vsel %vm903, %v899, 1326507024
  %v914 = vsel %vm902, %v896, %v913
  %v915 = vsel %vm901, %v912, %v914
  %v916 = vshll.u32 %v876, 8
  %v917 = vmul.u32.u64.compose %v916, %v915
  %v918 = vextract.low.u32 %v917
  %v919 = vextract.high.u32 %v917
  %v920 = vmul.u32.u64.compose %v916, %v911
  %v921 = vextract.low.u32 %v920
  %v922 = vextract.high.u32 %v920
  %v923 = vmul.u32 %v916, %v907
  %v924 = vadd.s32 %v919, %v921
  %vm925 = vc.u32 %v919, %v921
  %v926 = vadd.s32 %v922, 1
  %v927 = vsel %vm925, %v926, %v922
  %v928 = vadd.s32 %v923, %v927
  %v929 = vadd.s32 %v928, 536870912
  %v930 = vshrl.u32 %v929, 30
  %v931 = vshll.u32 %v930, 30
  %v932 = vsub.s32 %v928, %v931
  %vm933 = vcmp.lt.s32.totalorder %v932, 0
  %v934 = vsub.s32 0, %v932
  %v935 = vsel %vm933, %v934, %v932
  %v936 = vclz %v935
  %v937 = vsub.s32 %v936, 2
  %vm938 = vcmp.gt.s32.totalorder 0, %v937
  %v939 = vsel %vm938, 0, %v937
  %v940 = vsub.s32 32, %v939
  %v941 = vshll.u32 %v932, %v939
  %v942 = vshrl.u32 %v924, %v940
  %v943 = vor.u32 %v941, %v942
  %v944 = vsub.s32 4294967266, %v939
  %v945 = vadd.s32 %v944, 127
  %v946 = vshll.u32 %v945, 23
  %v947 = vor.u32 4788187, %v946
  %v948 = vand.u32 2147483647, %v947
  %v950 = vcvt.s32.f32 %v943
  %v951 = vmul.f32 %v950, %v948
  %v952 = vxor.u32 %v951, 2147483648
  %v953 = vsel %vm870, %v952, %v951
  %v954 = vsub.s32 4, %v930
  %v955 = vsel %vm870, %v954, %v930
  %v956 = vsel %vm869, %v196, %v953
  %v957 = vsel %vm869, 0, %v955
  %v958 = vcosq.f32.pop %v956
  %v959 = vsinq.f32.pop %v956
  %vm960 = vweird.f32 %v196
  %v961 = vadd.s32 %v957, 3
  %v962 = vand.u32 %v961, 3
  %vm963 = vcmp.lt.s32.totalorder %v962, 2
  %vm964 = vcmp.eq.s32.totalorder %v962, 0
  %v965 = vxor.u32 %v959, 2147483648
  %v966 = vsel %vm964, %v958, %v965
  %vm967 = vcmp.eq.s32.totalorder %v962, 2
  %v968 = vxor.u32 %v958, 2147483648
  %v969 = vsel %vm967, %v968, %v959
  %v970 = vsel %vm963, %v966, %v969
  %v971 = vsel %vm960, nan, %v970
  %v972 = vand.u32 2147483647, %v201
  %vm973 = vcmp.le.f32.partialorder %v972, 0.7853982
  %vm974 = vcmp.lt.s32.totalorder %v201, 0
  %v975 = vand.u32 %v201, 2139095040
  %v976 = vshrl.u32 %v975, 23
  %v977 = vsub.s32 %v976, 127
  %v978 = vand.u32 2147483647, %v201
  %v979 = vand.u32 %v978, 8388607
  %v980 = vor.u32 %v979, 8388608
  %v981 = vsub.s32 0, %v980
  %v982 = vadd.s32 %v977, 1
  %vm983 = vcmp.gt.s32.totalorder %v982, 0
  %v984 = vsel %vm983, %v982, 0
  %v985 = vshrl.u32 %v984, 5
  %v986 = vand.u32 %v984, 31
  %v987 = vsub.s32 32, %v986
  %v988 = vshrl.u32 683565275, %v987
  %v989 = vshll.u32 683565275, %v986
  %v990 = vshrl.u32 2475754826, %v987
  %v991 = vor.u32 %v989, %v990
  %v992 = vshll.u32 2475754826, %v986
  %v993 = vshrl.u32 2131351028, %v987
  %v994 = vor.u32 %v992, %v993
  %v995 = vshll.u32 2131351028, %v986
  %v996 = vshrl.u32 2102212464, %v987
  %v997 = vor.u32 %v995, %v996
  %v998 = vshll.u32 2102212464, %v986
  %v999 = vshrl.u32 920167782, %v987
  %v1000 = vor.u32 %v998, %v999
  %v1001 = vshll.u32 920167782, %v986
  %v1002 = vshrl.u32 1326507024, %v987
  %v1003 = vor.u32 %v1001, %v1002
  %vm1004 = vcmp.lt.s32.totalorder %v985, 1
  %vm1005 = vcmp.lt.s32.totalorder %v985, 2
  %vm1006 = vcmp.lt.s32.totalorder %v985, 3
  %vm1007 = vcmp.lt.s32.totalorder %v985, 4
  %v1008 = vsel %vm1004, %v988, %v991
  %v1009 = vsel %vm1007, %v997, 2102212464
  %v1010 = vsel %vm1006, %v994, %v1009
  %v1011 = vsel %vm1005, %v1008, %v1010
  %v1012 = vsel %vm1004, %v991, %v994
  %v1013 = vsel %vm1007, %v1000, 920167782
  %v1014 = vsel %vm1006, %v997, %v1013
  %v1015 = vsel %vm1005, %v1012, %v1014
  %v1016 = vsel %vm1004, %v994, %v997
  %v1017 = vsel %vm1007, %v1003, 1326507024
  %v1018 = vsel %vm1006, %v1000, %v1017
  %v1019 = vsel %vm1005, %v1016, %v1018
  %v1020 = vshll.u32 %v980, 8
  %v1021 = vmul.u32.u64.compose %v1020, %v1019
  %v1022 = vextract.low.u32 %v1021
  %v1023 = vextract.high.u32 %v1021
  %v1024 = vmul.u32.u64.compose %v1020, %v1015
  %v1025 = vextract.low.u32 %v1024
  %v1026 = vextract.high.u32 %v1024
  %v1027 = vmul.u32 %v1020, %v1011
  %v1028 = vadd.s32 %v1023, %v1025
  %vm1029 = vc.u32 %v1023, %v1025
  %v1030 = vadd.s32 %v1026, 1
  %v1031 = vsel %vm1029, %v1030, %v1026
  %v1032 = vadd.s32 %v1027, %v1031
  %v1033 = vadd.s32 %v1032, 536870912
  %v1034 = vshrl.u32 %v1033, 30
  %v1035 = vshll.u32 %v1034, 30
  %v1036 = vsub.s32 %v1032, %v1035
  %vm1037 = vcmp.lt.s32.totalorder %v1036, 0
  %v1038 = vsub.s32 0, %v1036
  %v1039 = vsel %vm1037, %v1038, %v1036
  %v1040 = vclz %v1039
  %v1041 = vsub.s32 %v1040, 2
  %vm1042 = vcmp.gt.s32.totalorder 0, %v1041
  %v1043 = vsel %vm1042, 0, %v1041
  %v1044 = vsub.s32 32, %v1043
  %v1045 = vshll.u32 %v1036, %v1043
  %v1046 = vshrl.u32 %v1028, %v1044
  %v1047 = vor.u32 %v1045, %v1046
  %v1048 = vsub.s32 4294967266, %v1043
  %v1049 = vadd.s32 %v1048, 127
  %v1050 = vshll.u32 %v1049, 23
  %v1051 = vor.u32 4788187, %v1050
  %v1052 = vand.u32 2147483647, %v1051
  %v1054 = vcvt.s32.f32 %v1047
  %v1055 = vmul.f32 %v1054, %v1052
  %v1056 = vxor.u32 %v1055, 2147483648
  %v1057 = vsel %vm974, %v1056, %v1055
  %v1058 = vsub.s32 4, %v1034
  %v1059 = vsel %vm974, %v1058, %v1034
  %v1060 = vsel %vm973, %v201, %v1057
  %v1061 = vsel %vm973, 0, %v1059
  %v1062 = vcosq.f32.pop %v1060
  %v1063 = vsinq.f32.pop %v1060
  %vm1064 = vweird.f32 %v201
  %v1065 = vadd.s32 %v1061, 3
  %v1066 = vand.u32 %v1065, 3
  %vm1067 = vcmp.lt.s32.totalorder %v1066, 2
  %vm1068 = vcmp.eq.s32.totalorder %v1066, 0
  %v1069 = vxor.u32 %v1063, 2147483648
  %v1070 = vsel %vm1068, %v1062, %v1069
  %vm1071 = vcmp.eq.s32.totalorder %v1066, 2
  %v1072 = vxor.u32 %v1062, 2147483648
  %v1073 = vsel %vm1071, %v1072, %v1063
  %v1074 = vsel %vm1067, %v1070, %v1073
  %v1075 = vsel %vm1064, nan, %v1074
  %v1076 = vand.u32 2147483647, %v206
  %vm1077 = vcmp.le.f32.partialorder %v1076, 0.7853982
  %vm1078 = vcmp.lt.s32.totalorder %v206, 0
  %v1079 = vand.u32 %v206, 2139095040
  %v1080 = vshrl.u32 %v1079, 23
  %v1081 = vsub.s32 %v1080, 127
  %v1082 = vand.u32 2147483647, %v206
  %v1083 = vand.u32 %v1082, 8388607
  %v1084 = vor.u32 %v1083, 8388608
  %v1085 = vsub.s32 0, %v1084
  %v1086 = vadd.s32 %v1081, 1
  %vm1087 = vcmp.gt.s32.totalorder %v1086, 0
  %v1088 = vsel %vm1087, %v1086, 0
  %v1089 = vshrl.u32 %v1088, 5
  %v1090 = vand.u32 %v1088, 31
  %v1091 = vsub.s32 32, %v1090
  %v1092 = vshrl.u32 683565275, %v1091
  %v1093 = vshll.u32 683565275, %v1090
  %v1094 = vshrl.u32 2475754826, %v1091
  %v1095 = vor.u32 %v1093, %v1094
  %v1096 = vshll.u32 2475754826, %v1090
  %v1097 = vshrl.u32 2131351028, %v1091
  %v1098 = vor.u32 %v1096, %v1097
  %v1099 = vshll.u32 2131351028, %v1090
  %v1100 = vshrl.u32 2102212464, %v1091
  %v1101 = vor.u32 %v1099, %v1100
  %v1102 = vshll.u32 2102212464, %v1090
  %v1103 = vshrl.u32 920167782, %v1091
  %v1104 = vor.u32 %v1102, %v1103
  %v1105 = vshll.u32 920167782, %v1090
  %v1106 = vshrl.u32 1326507024, %v1091
  %v1107 = vor.u32 %v1105, %v1106
  %vm1108 = vcmp.lt.s32.totalorder %v1089, 1
  %vm1109 = vcmp.lt.s32.totalorder %v1089, 2
  %vm1110 = vcmp.lt.s32.totalorder %v1089, 3
  %vm1111 = vcmp.lt.s32.totalorder %v1089, 4
  %v1112 = vsel %vm1108, %v1092, %v1095
  %v1113 = vsel %vm1111, %v1101, 2102212464
  %v1114 = vsel %vm1110, %v1098, %v1113
  %v1115 = vsel %vm1109, %v1112, %v1114
  %v1116 = vsel %vm1108, %v1095, %v1098
  %v1117 = vsel %vm1111, %v1104, 920167782
  %v1118 = vsel %vm1110, %v1101, %v1117
  %v1119 = vsel %vm1109, %v1116, %v1118
  %v1120 = vsel %vm1108, %v1098, %v1101
  %v1121 = vsel %vm1111, %v1107, 1326507024
  %v1122 = vsel %vm1110, %v1104, %v1121
  %v1123 = vsel %vm1109, %v1120, %v1122
  %v1124 = vshll.u32 %v1084, 8
  %v1125 = vmul.u32.u64.compose %v1124, %v1123
  %v1126 = vextract.low.u32 %v1125
  %v1127 = vextract.high.u32 %v1125
  %v1128 = vmul.u32.u64.compose %v1124, %v1119
  %v1129 = vextract.low.u32 %v1128
  %v1130 = vextract.high.u32 %v1128
  %v1131 = vmul.u32 %v1124, %v1115
  %v1132 = vadd.s32 %v1127, %v1129
  %vm1133 = vc.u32 %v1127, %v1129
  %v1134 = vadd.s32 %v1130, 1
  %v1135 = vsel %vm1133, %v1134, %v1130
  %v1136 = vadd.s32 %v1131, %v1135
  %v1137 = vadd.s32 %v1136, 536870912
  %v1138 = vshrl.u32 %v1137, 30
  %v1139 = vshll.u32 %v1138, 30
  %v1140 = vsub.s32 %v1136, %v1139
  %vm1141 = vcmp.lt.s32.totalorder %v1140, 0
  %v1142 = vsub.s32 0, %v1140
  %v1143 = vsel %vm1141, %v1142, %v1140
  %v1144 = vclz %v1143
  %v1145 = vsub.s32 %v1144, 2
  %vm1146 = vcmp.gt.s32.totalorder 0, %v1145
  %v1147 = vsel %vm1146, 0, %v1145
  %v1148 = vsub.s32 32, %v1147
  %v1149 = vshll.u32 %v1140, %v1147
  %v1150 = vshrl.u32 %v1132, %v1148
  %v1151 = vor.u32 %v1149, %v1150
  %v1152 = vsub.s32 4294967266, %v1147
  %v1153 = vadd.s32 %v1152, 127
  %v1154 = vshll.u32 %v1153, 23
  %v1155 = vor.u32 4788187, %v1154
  %v1156 = vand.u32 2147483647, %v1155
  %v1158 = vcvt.s32.f32 %v1151
  %v1159 = vmul.f32 %v1158, %v1156
  %v1160 = vxor.u32 %v1159, 2147483648
  %v1161 = vsel %vm1078, %v1160, %v1159
  %v1162 = vsub.s32 4, %v1138
  %v1163 = vsel %vm1078, %v1162, %v1138
  %v1164 = vsel %vm1077, %v206, %v1161
  %v1165 = vsel %vm1077, 0, %v1163
  %v1166 = vcosq.f32.pop %v1164
  %v1167 = vsinq.f32.pop %v1164
  %vm1168 = vweird.f32 %v206
  %v1169 = vadd.s32 %v1165, 3
  %v1170 = vand.u32 %v1169, 3
  %vm1171 = vcmp.lt.s32.totalorder %v1170, 2
  %vm1172 = vcmp.eq.s32.totalorder %v1170, 0
  %v1173 = vxor.u32 %v1167, 2147483648
  %v1174 = vsel %vm1172, %v1166, %v1173
  %vm1175 = vcmp.eq.s32.totalorder %v1170, 2
  %v1176 = vxor.u32 %v1166, 2147483648
  %v1177 = vsel %vm1175, %v1176, %v1167
  %v1178 = vsel %vm1171, %v1174, %v1177
  %v1179 = vsel %vm1168, nan, %v1178
  %v1180 = vand.u32 2147483647, %v211
  %vm1181 = vcmp.le.f32.partialorder %v1180, 0.7853982
  %vm1182 = vcmp.lt.s32.totalorder %v211, 0
  %v1183 = vand.u32 %v211, 2139095040
  %v1184 = vshrl.u32 %v1183, 23
  %v1185 = vsub.s32 %v1184, 127
  %v1186 = vand.u32 2147483647, %v211
  %v1187 = vand.u32 %v1186, 8388607
  %v1188 = vor.u32 %v1187, 8388608
  %v1189 = vsub.s32 0, %v1188
  %v1190 = vadd.s32 %v1185, 1
  %vm1191 = vcmp.gt.s32.totalorder %v1190, 0
  %v1192 = vsel %vm1191, %v1190, 0
  %v1193 = vshrl.u32 %v1192, 5
  %v1194 = vand.u32 %v1192, 31
  %v1195 = vsub.s32 32, %v1194
  %v1196 = vshrl.u32 683565275, %v1195
  %v1197 = vshll.u32 683565275, %v1194
  %v1198 = vshrl.u32 2475754826, %v1195
  %v1199 = vor.u32 %v1197, %v1198
  %v1200 = vshll.u32 2475754826, %v1194
  %v1201 = vshrl.u32 2131351028, %v1195
  %v1202 = vor.u32 %v1200, %v1201
  %v1203 = vshll.u32 2131351028, %v1194
  %v1204 = vshrl.u32 2102212464, %v1195
  %v1205 = vor.u32 %v1203, %v1204
  %v1206 = vshll.u32 2102212464, %v1194
  %v1207 = vshrl.u32 920167782, %v1195
  %v1208 = vor.u32 %v1206, %v1207
  %v1209 = vshll.u32 920167782, %v1194
  %v1210 = vshrl.u32 1326507024, %v1195
  %v1211 = vor.u32 %v1209, %v1210
  %vm1212 = vcmp.lt.s32.totalorder %v1193, 1
  %vm1213 = vcmp.lt.s32.totalorder %v1193, 2
  %vm1214 = vcmp.lt.s32.totalorder %v1193, 3
  %vm1215 = vcmp.lt.s32.totalorder %v1193, 4
  %v1216 = vsel %vm1212, %v1196, %v1199
  %v1217 = vsel %vm1215, %v1205, 2102212464
  %v1218 = vsel %vm1214, %v1202, %v1217
  %v1219 = vsel %vm1213, %v1216, %v1218
  %v1220 = vsel %vm1212, %v1199, %v1202
  %v1221 = vsel %vm1215, %v1208, 920167782
  %v1222 = vsel %vm1214, %v1205, %v1221
  %v1223 = vsel %vm1213, %v1220, %v1222
  %v1224 = vsel %vm1212, %v1202, %v1205
  %v1225 = vsel %vm1215, %v1211, 1326507024
  %v1226 = vsel %vm1214, %v1208, %v1225
  %v1227 = vsel %vm1213, %v1224, %v1226
  %v1228 = vshll.u32 %v1188, 8
  %v1229 = vmul.u32.u64.compose %v1228, %v1227
  %v1230 = vextract.low.u32 %v1229
  %v1231 = vextract.high.u32 %v1229
  %v1232 = vmul.u32.u64.compose %v1228, %v1223
  %v1233 = vextract.low.u32 %v1232
  %v1234 = vextract.high.u32 %v1232
  %v1235 = vmul.u32 %v1228, %v1219
  %v1236 = vadd.s32 %v1231, %v1233
  %vm1237 = vc.u32 %v1231, %v1233
  %v1238 = vadd.s32 %v1234, 1
  %v1239 = vsel %vm1237, %v1238, %v1234
  %v1240 = vadd.s32 %v1235, %v1239
  %v1241 = vadd.s32 %v1240, 536870912
  %v1242 = vshrl.u32 %v1241, 30
  %v1243 = vshll.u32 %v1242, 30
  %v1244 = vsub.s32 %v1240, %v1243
  %vm1245 = vcmp.lt.s32.totalorder %v1244, 0
  %v1246 = vsub.s32 0, %v1244
  %v1247 = vsel %vm1245, %v1246, %v1244
  %v1248 = vclz %v1247
  %v1249 = vsub.s32 %v1248, 2
  %vm1250 = vcmp.gt.s32.totalorder 0, %v1249
  %v1251 = vsel %vm1250, 0, %v1249
  %v1252 = vsub.s32 32, %v1251
  %v1253 = vshll.u32 %v1244, %v1251
  %v1254 = vshrl.u32 %v1236, %v1252
  %v1255 = vor.u32 %v1253, %v1254
  %v1256 = vsub.s32 4294967266, %v1251
  %v1257 = vadd.s32 %v1256, 127
  %v1258 = vshll.u32 %v1257, 23
  %v1259 = vor.u32 4788187, %v1258
  %v1260 = vand.u32 2147483647, %v1259
  %v1262 = vcvt.s32.f32 %v1255
  %v1263 = vmul.f32 %v1262, %v1260
  %v1264 = vxor.u32 %v1263, 2147483648
  %v1265 = vsel %vm1182, %v1264, %v1263
  %v1266 = vsub.s32 4, %v1242
  %v1267 = vsel %vm1182, %v1266, %v1242
  %v1268 = vsel %vm1181, %v211, %v1265
  %v1269 = vsel %vm1181, 0, %v1267
  %v1270 = vcosq.f32.pop %v1268
  %v1271 = vsinq.f32.pop %v1268
  %vm1272 = vweird.f32 %v211
  %v1273 = vadd.s32 %v1269, 3
  %v1274 = vand.u32 %v1273, 3
  %vm1275 = vcmp.lt.s32.totalorder %v1274, 2
  %vm1276 = vcmp.eq.s32.totalorder %v1274, 0
  %v1277 = vxor.u32 %v1271, 2147483648
  %v1278 = vsel %vm1276, %v1270, %v1277
  %vm1279 = vcmp.eq.s32.totalorder %v1274, 2
  %v1280 = vxor.u32 %v1270, 2147483648
  %v1281 = vsel %vm1279, %v1280, %v1271
  %v1282 = vsel %vm1275, %v1278, %v1281
  %v1283 = vsel %vm1272, nan, %v1282
  %v1284 = vand.u32 2147483647, %v216
  %vm1285 = vcmp.le.f32.partialorder %v1284, 0.7853982
  %vm1286 = vcmp.lt.s32.totalorder %v216, 0
  %v1287 = vand.u32 %v216, 2139095040
  %v1288 = vshrl.u32 %v1287, 23
  %v1289 = vsub.s32 %v1288, 127
  %v1290 = vand.u32 2147483647, %v216
  %v1291 = vand.u32 %v1290, 8388607
  %v1292 = vor.u32 %v1291, 8388608
  %v1293 = vsub.s32 0, %v1292
  %v1294 = vadd.s32 %v1289, 1
  %vm1295 = vcmp.gt.s32.totalorder %v1294, 0
  %v1296 = vsel %vm1295, %v1294, 0
  %v1297 = vshrl.u32 %v1296, 5
  %v1298 = vand.u32 %v1296, 31
  %v1299 = vsub.s32 32, %v1298
  %v1300 = vshrl.u32 683565275, %v1299
  %v1301 = vshll.u32 683565275, %v1298
  %v1302 = vshrl.u32 2475754826, %v1299
  %v1303 = vor.u32 %v1301, %v1302
  %v1304 = vshll.u32 2475754826, %v1298
  %v1305 = vshrl.u32 2131351028, %v1299
  %v1306 = vor.u32 %v1304, %v1305
  %v1307 = vshll.u32 2131351028, %v1298
  %v1308 = vshrl.u32 2102212464, %v1299
  %v1309 = vor.u32 %v1307, %v1308
  %v1310 = vshll.u32 2102212464, %v1298
  %v1311 = vshrl.u32 920167782, %v1299
  %v1312 = vor.u32 %v1310, %v1311
  %v1313 = vshll.u32 920167782, %v1298
  %v1314 = vshrl.u32 1326507024, %v1299
  %v1315 = vor.u32 %v1313, %v1314
  %vm1316 = vcmp.lt.s32.totalorder %v1297, 1
  %vm1317 = vcmp.lt.s32.totalorder %v1297, 2
  %vm1318 = vcmp.lt.s32.totalorder %v1297, 3
  %vm1319 = vcmp.lt.s32.totalorder %v1297, 4
  %v1320 = vsel %vm1316, %v1300, %v1303
  %v1321 = vsel %vm1319, %v1309, 2102212464
  %v1322 = vsel %vm1318, %v1306, %v1321
  %v1323 = vsel %vm1317, %v1320, %v1322
  %v1324 = vsel %vm1316, %v1303, %v1306
  %v1325 = vsel %vm1319, %v1312, 920167782
  %v1326 = vsel %vm1318, %v1309, %v1325
  %v1327 = vsel %vm1317, %v1324, %v1326
  %v1328 = vsel %vm1316, %v1306, %v1309
  %v1329 = vsel %vm1319, %v1315, 1326507024
  %v1330 = vsel %vm1318, %v1312, %v1329
  %v1331 = vsel %vm1317, %v1328, %v1330
  %v1332 = vshll.u32 %v1292, 8
  %v1333 = vmul.u32.u64.compose %v1332, %v1331
  %v1334 = vextract.low.u32 %v1333
  %v1335 = vextract.high.u32 %v1333
  %v1336 = vmul.u32.u64.compose %v1332, %v1327
  %v1337 = vextract.low.u32 %v1336
  %v1338 = vextract.high.u32 %v1336
  %v1339 = vmul.u32 %v1332, %v1323
  %v1340 = vadd.s32 %v1335, %v1337
  %vm1341 = vc.u32 %v1335, %v1337
  %v1342 = vadd.s32 %v1338, 1
  %v1343 = vsel %vm1341, %v1342, %v1338
  %v1344 = vadd.s32 %v1339, %v1343
  %v1345 = vadd.s32 %v1344, 536870912
  %v1346 = vshrl.u32 %v1345, 30
  %v1347 = vshll.u32 %v1346, 30
  %v1348 = vsub.s32 %v1344, %v1347
  %vm1349 = vcmp.lt.s32.totalorder %v1348, 0
  %v1350 = vsub.s32 0, %v1348
  %v1351 = vsel %vm1349, %v1350, %v1348
  %v1352 = vclz %v1351
  %v1353 = vsub.s32 %v1352, 2
  %vm1354 = vcmp.gt.s32.totalorder 0, %v1353
  %v1355 = vsel %vm1354, 0, %v1353
  %v1356 = vsub.s32 32, %v1355
  %v1357 = vshll.u32 %v1348, %v1355
  %v1358 = vshrl.u32 %v1340, %v1356
  %v1359 = vor.u32 %v1357, %v1358
  %v1360 = vsub.s32 4294967266, %v1355
  %v1361 = vadd.s32 %v1360, 127
  %v1362 = vshll.u32 %v1361, 23
  %v1363 = vor.u32 4788187, %v1362
  %v1364 = vand.u32 2147483647, %v1363
  %v1366 = vcvt.s32.f32 %v1359
  %v1367 = vmul.f32 %v1366, %v1364
  %v1368 = vxor.u32 %v1367, 2147483648
  %v1369 = vsel %vm1286, %v1368, %v1367
  %v1370 = vsub.s32 4, %v1346
  %v1371 = vsel %vm1286, %v1370, %v1346
  %v1372 = vsel %vm1285, %v216, %v1369
  %v1373 = vsel %vm1285, 0, %v1371
  %v1374 = vcosq.f32.pop %v1372
  %v1375 = vsinq.f32.pop %v1372
  %vm1376 = vweird.f32 %v216
  %v1377 = vadd.s32 %v1373, 3
  %v1378 = vand.u32 %v1377, 3
  %vm1379 = vcmp.lt.s32.totalorder %v1378, 2
  %vm1380 = vcmp.eq.s32.totalorder %v1378, 0
  %v1381 = vxor.u32 %v1375, 2147483648
  %v1382 = vsel %vm1380, %v1374, %v1381
  %vm1383 = vcmp.eq.s32.totalorder %v1378, 2
  %v1384 = vxor.u32 %v1374, 2147483648
  %v1385 = vsel %vm1383, %v1384, %v1375
  %v1386 = vsel %vm1379, %v1382, %v1385
  %v1387 = vsel %vm1376, nan, %v1386
  %v1388 = vand.u32 2147483647, %v221
  %vm1389 = vcmp.le.f32.partialorder %v1388, 0.7853982
  %vm1390 = vcmp.lt.s32.totalorder %v221, 0
  %v1391 = vand.u32 %v221, 2139095040
  %v1392 = vshrl.u32 %v1391, 23
  %v1393 = vsub.s32 %v1392, 127
  %v1394 = vand.u32 2147483647, %v221
  %v1395 = vand.u32 %v1394, 8388607
  %v1396 = vor.u32 %v1395, 8388608
  %v1397 = vsub.s32 0, %v1396
  %v1398 = vadd.s32 %v1393, 1
  %vm1399 = vcmp.gt.s32.totalorder %v1398, 0
  %v1400 = vsel %vm1399, %v1398, 0
  %v1401 = vshrl.u32 %v1400, 5
  %v1402 = vand.u32 %v1400, 31
  %v1403 = vsub.s32 32, %v1402
  %v1404 = vshrl.u32 683565275, %v1403
  %v1405 = vshll.u32 683565275, %v1402
  %v1406 = vshrl.u32 2475754826, %v1403
  %v1407 = vor.u32 %v1405, %v1406
  %v1408 = vshll.u32 2475754826, %v1402
  %v1409 = vshrl.u32 2131351028, %v1403
  %v1410 = vor.u32 %v1408, %v1409
  %v1411 = vshll.u32 2131351028, %v1402
  %v1412 = vshrl.u32 2102212464, %v1403
  %v1413 = vor.u32 %v1411, %v1412
  %v1414 = vshll.u32 2102212464, %v1402
  %v1415 = vshrl.u32 920167782, %v1403
  %v1416 = vor.u32 %v1414, %v1415
  %v1417 = vshll.u32 920167782, %v1402
  %v1418 = vshrl.u32 1326507024, %v1403
  %v1419 = vor.u32 %v1417, %v1418
  %vm1420 = vcmp.lt.s32.totalorder %v1401, 1
  %vm1421 = vcmp.lt.s32.totalorder %v1401, 2
  %vm1422 = vcmp.lt.s32.totalorder %v1401, 3
  %vm1423 = vcmp.lt.s32.totalorder %v1401, 4
  %v1424 = vsel %vm1420, %v1404, %v1407
  %v1425 = vsel %vm1423, %v1413, 2102212464
  %v1426 = vsel %vm1422, %v1410, %v1425
  %v1427 = vsel %vm1421, %v1424, %v1426
  %v1428 = vsel %vm1420, %v1407, %v1410
  %v1429 = vsel %vm1423, %v1416, 920167782
  %v1430 = vsel %vm1422, %v1413, %v1429
  %v1431 = vsel %vm1421, %v1428, %v1430
  %v1432 = vsel %vm1420, %v1410, %v1413
  %v1433 = vsel %vm1423, %v1419, 1326507024
  %v1434 = vsel %vm1422, %v1416, %v1433
  %v1435 = vsel %vm1421, %v1432, %v1434
  %v1436 = vshll.u32 %v1396, 8
  %v1437 = vmul.u32.u64.compose %v1436, %v1435
  %v1438 = vextract.low.u32 %v1437
  %v1439 = vextract.high.u32 %v1437
  %v1440 = vmul.u32.u64.compose %v1436, %v1431
  %v1441 = vextract.low.u32 %v1440
  %v1442 = vextract.high.u32 %v1440
  %v1443 = vmul.u32 %v1436, %v1427
  %v1444 = vadd.s32 %v1439, %v1441
  %vm1445 = vc.u32 %v1439, %v1441
  %v1446 = vadd.s32 %v1442, 1
  %v1447 = vsel %vm1445, %v1446, %v1442
  %v1448 = vadd.s32 %v1443, %v1447
  %v1449 = vadd.s32 %v1448, 536870912
  %v1450 = vshrl.u32 %v1449, 30
  %v1451 = vshll.u32 %v1450, 30
  %v1452 = vsub.s32 %v1448, %v1451
  %vm1453 = vcmp.lt.s32.totalorder %v1452, 0
  %v1454 = vsub.s32 0, %v1452
  %v1455 = vsel %vm1453, %v1454, %v1452
  %v1456 = vclz %v1455
  %v1457 = vsub.s32 %v1456, 2
  %vm1458 = vcmp.gt.s32.totalorder 0, %v1457
  %v1459 = vsel %vm1458, 0, %v1457
  %v1460 = vsub.s32 32, %v1459
  %v1461 = vshll.u32 %v1452, %v1459
  %v1462 = vshrl.u32 %v1444, %v1460
  %v1463 = vor.u32 %v1461, %v1462
  %v1464 = vsub.s32 4294967266, %v1459
  %v1465 = vadd.s32 %v1464, 127
  %v1466 = vshll.u32 %v1465, 23
  %v1467 = vor.u32 4788187, %v1466
  %v1468 = vand.u32 2147483647, %v1467
  %v1470 = vcvt.s32.f32 %v1463
  %v1471 = vmul.f32 %v1470, %v1468
  %v1472 = vxor.u32 %v1471, 2147483648
  %v1473 = vsel %vm1390, %v1472, %v1471
  %v1474 = vsub.s32 4, %v1450
  %v1475 = vsel %vm1390, %v1474, %v1450
  %v1476 = vsel %vm1389, %v221, %v1473
  %v1477 = vsel %vm1389, 0, %v1475
  %v1478 = vcosq.f32.pop %v1476
  %v1479 = vsinq.f32.pop %v1476
  %vm1480 = vweird.f32 %v221
  %v1481 = vadd.s32 %v1477, 3
  %v1482 = vand.u32 %v1481, 3
  %vm1483 = vcmp.lt.s32.totalorder %v1482, 2
  %vm1484 = vcmp.eq.s32.totalorder %v1482, 0
  %v1485 = vxor.u32 %v1479, 2147483648
  %v1486 = vsel %vm1484, %v1478, %v1485
  %vm1487 = vcmp.eq.s32.totalorder %v1482, 2
  %v1488 = vxor.u32 %v1478, 2147483648
  %v1489 = vsel %vm1487, %v1488, %v1479
  %v1490 = vsel %vm1483, %v1486, %v1489
  %v1491 = vsel %vm1480, nan, %v1490
  %v1492 = vand.u32 2147483647, %v226
  %vm1493 = vcmp.le.f32.partialorder %v1492, 0.7853982
  %vm1494 = vcmp.lt.s32.totalorder %v226, 0
  %v1495 = vand.u32 %v226, 2139095040
  %v1496 = vshrl.u32 %v1495, 23
  %v1497 = vsub.s32 %v1496, 127
  %v1498 = vand.u32 2147483647, %v226
  %v1499 = vand.u32 %v1498, 8388607
  %v1500 = vor.u32 %v1499, 8388608
  %v1501 = vsub.s32 0, %v1500
  %v1502 = vadd.s32 %v1497, 1
  %vm1503 = vcmp.gt.s32.totalorder %v1502, 0
  %v1504 = vsel %vm1503, %v1502, 0
  %v1505 = vshrl.u32 %v1504, 5
  %v1506 = vand.u32 %v1504, 31
  %v1507 = vsub.s32 32, %v1506
  %v1508 = vshrl.u32 683565275, %v1507
  %v1509 = vshll.u32 683565275, %v1506
  %v1510 = vshrl.u32 2475754826, %v1507
  %v1511 = vor.u32 %v1509, %v1510
  %v1512 = vshll.u32 2475754826, %v1506
  %v1513 = vshrl.u32 2131351028, %v1507
  %v1514 = vor.u32 %v1512, %v1513
  %v1515 = vshll.u32 2131351028, %v1506
  %v1516 = vshrl.u32 2102212464, %v1507
  %v1517 = vor.u32 %v1515, %v1516
  %v1518 = vshll.u32 2102212464, %v1506
  %v1519 = vshrl.u32 920167782, %v1507
  %v1520 = vor.u32 %v1518, %v1519
  %v1521 = vshll.u32 920167782, %v1506
  %v1522 = vshrl.u32 1326507024, %v1507
  %v1523 = vor.u32 %v1521, %v1522
  %vm1524 = vcmp.lt.s32.totalorder %v1505, 1
  %vm1525 = vcmp.lt.s32.totalorder %v1505, 2
  %vm1526 = vcmp.lt.s32.totalorder %v1505, 3
  %vm1527 = vcmp.lt.s32.totalorder %v1505, 4
  %v1528 = vsel %vm1524, %v1508, %v1511
  %v1529 = vsel %vm1527, %v1517, 2102212464
  %v1530 = vsel %vm1526, %v1514, %v1529
  %v1531 = vsel %vm1525, %v1528, %v1530
  %v1532 = vsel %vm1524, %v1511, %v1514
  %v1533 = vsel %vm1527, %v1520, 920167782
  %v1534 = vsel %vm1526, %v1517, %v1533
  %v1535 = vsel %vm1525, %v1532, %v1534
  %v1536 = vsel %vm1524, %v1514, %v1517
  %v1537 = vsel %vm1527, %v1523, 1326507024
  %v1538 = vsel %vm1526, %v1520, %v1537
  %v1539 = vsel %vm1525, %v1536, %v1538
  %v1540 = vshll.u32 %v1500, 8
  %v1541 = vmul.u32.u64.compose %v1540, %v1539
  %v1542 = vextract.low.u32 %v1541
  %v1543 = vextract.high.u32 %v1541
  %v1544 = vmul.u32.u64.compose %v1540, %v1535
  %v1545 = vextract.low.u32 %v1544
  %v1546 = vextract.high.u32 %v1544
  %v1547 = vmul.u32 %v1540, %v1531
  %v1548 = vadd.s32 %v1543, %v1545
  %vm1549 = vc.u32 %v1543, %v1545
  %v1550 = vadd.s32 %v1546, 1
  %v1551 = vsel %vm1549, %v1550, %v1546
  %v1552 = vadd.s32 %v1547, %v1551
  %v1553 = vadd.s32 %v1552, 536870912
  %v1554 = vshrl.u32 %v1553, 30
  %v1555 = vshll.u32 %v1554, 30
  %v1556 = vsub.s32 %v1552, %v1555
  %vm1557 = vcmp.lt.s32.totalorder %v1556, 0
  %v1558 = vsub.s32 0, %v1556
  %v1559 = vsel %vm1557, %v1558, %v1556
  %v1560 = vclz %v1559
  %v1561 = vsub.s32 %v1560, 2
  %vm1562 = vcmp.gt.s32.totalorder 0, %v1561
  %v1563 = vsel %vm1562, 0, %v1561
  %v1564 = vsub.s32 32, %v1563
  %v1565 = vshll.u32 %v1556, %v1563
  %v1566 = vshrl.u32 %v1548, %v1564
  %v1567 = vor.u32 %v1565, %v1566
  %v1568 = vsub.s32 4294967266, %v1563
  %v1569 = vadd.s32 %v1568, 127
  %v1570 = vshll.u32 %v1569, 23
  %v1571 = vor.u32 4788187, %v1570
  %v1572 = vand.u32 2147483647, %v1571
  %v1574 = vcvt.s32.f32 %v1567
  %v1575 = vmul.f32 %v1574, %v1572
  %v1576 = vxor.u32 %v1575, 2147483648
  %v1577 = vsel %vm1494, %v1576, %v1575
  %v1578 = vsub.s32 4, %v1554
  %v1579 = vsel %vm1494, %v1578, %v1554
  %v1580 = vsel %vm1493, %v226, %v1577
  %v1581 = vsel %vm1493, 0, %v1579
  %v1582 = vcosq.f32.pop %v1580
  %v1583 = vsinq.f32.pop %v1580
  %vm1584 = vweird.f32 %v226
  %v1585 = vadd.s32 %v1581, 3
  %v1586 = vand.u32 %v1585, 3
  %vm1587 = vcmp.lt.s32.totalorder %v1586, 2
  %vm1588 = vcmp.eq.s32.totalorder %v1586, 0
  %v1589 = vxor.u32 %v1583, 2147483648
  %v1590 = vsel %vm1588, %v1582, %v1589
  %vm1591 = vcmp.eq.s32.totalorder %v1586, 2
  %v1592 = vxor.u32 %v1582, 2147483648
  %v1593 = vsel %vm1591, %v1592, %v1583
  %v1594 = vsel %vm1587, %v1590, %v1593
  %v1595 = vsel %vm1584, nan, %v1594
  %v1596 = vand.u32 2147483647, %v231
  %vm1597 = vcmp.le.f32.partialorder %v1596, 0.7853982
  %vm1598 = vcmp.lt.s32.totalorder %v231, 0
  %v1599 = vand.u32 %v231, 2139095040
  %v1600 = vshrl.u32 %v1599, 23
  %v1601 = vsub.s32 %v1600, 127
  %v1602 = vand.u32 2147483647, %v231
  %v1603 = vand.u32 %v1602, 8388607
  %v1604 = vor.u32 %v1603, 8388608
  %v1605 = vsub.s32 0, %v1604
  %v1606 = vadd.s32 %v1601, 1
  %vm1607 = vcmp.gt.s32.totalorder %v1606, 0
  %v1608 = vsel %vm1607, %v1606, 0
  %v1609 = vshrl.u32 %v1608, 5
  %v1610 = vand.u32 %v1608, 31
  %v1611 = vsub.s32 32, %v1610
  %v1612 = vshrl.u32 683565275, %v1611
  %v1613 = vshll.u32 683565275, %v1610
  %v1614 = vshrl.u32 2475754826, %v1611
  %v1615 = vor.u32 %v1613, %v1614
  %v1616 = vshll.u32 2475754826, %v1610
  %v1617 = vshrl.u32 2131351028, %v1611
  %v1618 = vor.u32 %v1616, %v1617
  %v1619 = vshll.u32 2131351028, %v1610
  %v1620 = vshrl.u32 2102212464, %v1611
  %v1621 = vor.u32 %v1619, %v1620
  %v1622 = vshll.u32 2102212464, %v1610
  %v1623 = vshrl.u32 920167782, %v1611
  %v1624 = vor.u32 %v1622, %v1623
  %v1625 = vshll.u32 920167782, %v1610
  %v1626 = vshrl.u32 1326507024, %v1611
  %v1627 = vor.u32 %v1625, %v1626
  %vm1628 = vcmp.lt.s32.totalorder %v1609, 1
  %vm1629 = vcmp.lt.s32.totalorder %v1609, 2
  %vm1630 = vcmp.lt.s32.totalorder %v1609, 3
  %vm1631 = vcmp.lt.s32.totalorder %v1609, 4
  %v1632 = vsel %vm1628, %v1612, %v1615
  %v1633 = vsel %vm1631, %v1621, 2102212464
  %v1634 = vsel %vm1630, %v1618, %v1633
  %v1635 = vsel %vm1629, %v1632, %v1634
  %v1636 = vsel %vm1628, %v1615, %v1618
  %v1637 = vsel %vm1631, %v1624, 920167782
  %v1638 = vsel %vm1630, %v1621, %v1637
  %v1639 = vsel %vm1629, %v1636, %v1638
  %v1640 = vsel %vm1628, %v1618, %v1621
  %v1641 = vsel %vm1631, %v1627, 1326507024
  %v1642 = vsel %vm1630, %v1624, %v1641
  %v1643 = vsel %vm1629, %v1640, %v1642
  %v1644 = vshll.u32 %v1604, 8
  %v1645 = vmul.u32.u64.compose %v1644, %v1643
  %v1646 = vextract.low.u32 %v1645
  %v1647 = vextract.high.u32 %v1645
  %v1648 = vmul.u32.u64.compose %v1644, %v1639
  %v1649 = vextract.low.u32 %v1648
  %v1650 = vextract.high.u32 %v1648
  %v1651 = vmul.u32 %v1644, %v1635
  %v1652 = vadd.s32 %v1647, %v1649
  %vm1653 = vc.u32 %v1647, %v1649
  %v1654 = vadd.s32 %v1650, 1
  %v1655 = vsel %vm1653, %v1654, %v1650
  %v1656 = vadd.s32 %v1651, %v1655
  %v1657 = vadd.s32 %v1656, 536870912
  %v1658 = vshrl.u32 %v1657, 30
  %v1659 = vshll.u32 %v1658, 30
  %v1660 = vsub.s32 %v1656, %v1659
  %vm1661 = vcmp.lt.s32.totalorder %v1660, 0
  %v1662 = vsub.s32 0, %v1660
  %v1663 = vsel %vm1661, %v1662, %v1660
  %v1664 = vclz %v1663
  %v1665 = vsub.s32 %v1664, 2
  %vm1666 = vcmp.gt.s32.totalorder 0, %v1665
  %v1667 = vsel %vm1666, 0, %v1665
  %v1668 = vsub.s32 32, %v1667
  %v1669 = vshll.u32 %v1660, %v1667
  %v1670 = vshrl.u32 %v1652, %v1668
  %v1671 = vor.u32 %v1669, %v1670
  %v1672 = vsub.s32 4294967266, %v1667
  %v1673 = vadd.s32 %v1672, 127
  %v1674 = vshll.u32 %v1673, 23
  %v1675 = vor.u32 4788187, %v1674
  %v1676 = vand.u32 2147483647, %v1675
  %v1678 = vcvt.s32.f32 %v1671
  %v1679 = vmul.f32 %v1678, %v1676
  %v1680 = vxor.u32 %v1679, 2147483648
  %v1681 = vsel %vm1598, %v1680, %v1679
  %v1682 = vsub.s32 4, %v1658
  %v1683 = vsel %vm1598, %v1682, %v1658
  %v1684 = vsel %vm1597, %v231, %v1681
  %v1685 = vsel %vm1597, 0, %v1683
  %v1686 = vcosq.f32.pop %v1684
  %v1687 = vsinq.f32.pop %v1684
  %vm1688 = vweird.f32 %v231
  %v1689 = vadd.s32 %v1685, 3
  %v1690 = vand.u32 %v1689, 3
  %vm1691 = vcmp.lt.s32.totalorder %v1690, 2
  %vm1692 = vcmp.eq.s32.totalorder %v1690, 0
  %v1693 = vxor.u32 %v1687, 2147483648
  %v1694 = vsel %vm1692, %v1686, %v1693
  %vm1695 = vcmp.eq.s32.totalorder %v1690, 2
  %v1696 = vxor.u32 %v1686, 2147483648
  %v1697 = vsel %vm1695, %v1696, %v1687
  %v1698 = vsel %vm1691, %v1694, %v1697
  %v1699 = vsel %vm1688, nan, %v1698
  %v1700 = vand.u32 2147483647, %v236
  %vm1701 = vcmp.le.f32.partialorder %v1700, 0.7853982
  %vm1702 = vcmp.lt.s32.totalorder %v236, 0
  %v1703 = vand.u32 %v236, 2139095040
  %v1704 = vshrl.u32 %v1703, 23
  %v1705 = vsub.s32 %v1704, 127
  %v1706 = vand.u32 2147483647, %v236
  %v1707 = vand.u32 %v1706, 8388607
  %v1708 = vor.u32 %v1707, 8388608
  %v1709 = vsub.s32 0, %v1708
  %v1710 = vadd.s32 %v1705, 1
  %vm1711 = vcmp.gt.s32.totalorder %v1710, 0
  %v1712 = vsel %vm1711, %v1710, 0
  %v1713 = vshrl.u32 %v1712, 5
  %v1714 = vand.u32 %v1712, 31
  %v1715 = vsub.s32 32, %v1714
  %v1716 = vshrl.u32 683565275, %v1715
  %v1717 = vshll.u32 683565275, %v1714
  %v1718 = vshrl.u32 2475754826, %v1715
  %v1719 = vor.u32 %v1717, %v1718
  %v1720 = vshll.u32 2475754826, %v1714
  %v1721 = vshrl.u32 2131351028, %v1715
  %v1722 = vor.u32 %v1720, %v1721
  %v1723 = vshll.u32 2131351028, %v1714
  %v1724 = vshrl.u32 2102212464, %v1715
  %v1725 = vor.u32 %v1723, %v1724
  %v1726 = vshll.u32 2102212464, %v1714
  %v1727 = vshrl.u32 920167782, %v1715
  %v1728 = vor.u32 %v1726, %v1727
  %v1729 = vshll.u32 920167782, %v1714
  %v1730 = vshrl.u32 1326507024, %v1715
  %v1731 = vor.u32 %v1729, %v1730
  %vm1732 = vcmp.lt.s32.totalorder %v1713, 1
  %vm1733 = vcmp.lt.s32.totalorder %v1713, 2
  %vm1734 = vcmp.lt.s32.totalorder %v1713, 3
  %vm1735 = vcmp.lt.s32.totalorder %v1713, 4
  %v1736 = vsel %vm1732, %v1716, %v1719
  %v1737 = vsel %vm1735, %v1725, 2102212464
  %v1738 = vsel %vm1734, %v1722, %v1737
  %v1739 = vsel %vm1733, %v1736, %v1738
  %v1740 = vsel %vm1732, %v1719, %v1722
  %v1741 = vsel %vm1735, %v1728, 920167782
  %v1742 = vsel %vm1734, %v1725, %v1741
  %v1743 = vsel %vm1733, %v1740, %v1742
  %v1744 = vsel %vm1732, %v1722, %v1725
  %v1745 = vsel %vm1735, %v1731, 1326507024
  %v1746 = vsel %vm1734, %v1728, %v1745
  %v1747 = vsel %vm1733, %v1744, %v1746
  %v1748 = vshll.u32 %v1708, 8
  %v1749 = vmul.u32.u64.compose %v1748, %v1747
  %v1750 = vextract.low.u32 %v1749
  %v1751 = vextract.high.u32 %v1749
  %v1752 = vmul.u32.u64.compose %v1748, %v1743
  %v1753 = vextract.low.u32 %v1752
  %v1754 = vextract.high.u32 %v1752
  %v1755 = vmul.u32 %v1748, %v1739
  %v1756 = vadd.s32 %v1751, %v1753
  %vm1757 = vc.u32 %v1751, %v1753
  %v1758 = vadd.s32 %v1754, 1
  %v1759 = vsel %vm1757, %v1758, %v1754
  %v1760 = vadd.s32 %v1755, %v1759
  %v1761 = vadd.s32 %v1760, 536870912
  %v1762 = vshrl.u32 %v1761, 30
  %v1763 = vshll.u32 %v1762, 30
  %v1764 = vsub.s32 %v1760, %v1763
  %vm1765 = vcmp.lt.s32.totalorder %v1764, 0
  %v1766 = vsub.s32 0, %v1764
  %v1767 = vsel %vm1765, %v1766, %v1764
  %v1768 = vclz %v1767
  %v1769 = vsub.s32 %v1768, 2
  %vm1770 = vcmp.gt.s32.totalorder 0, %v1769
  %v1771 = vsel %vm1770, 0, %v1769
  %v1772 = vsub.s32 32, %v1771
  %v1773 = vshll.u32 %v1764, %v1771
  %v1774 = vshrl.u32 %v1756, %v1772
  %v1775 = vor.u32 %v1773, %v1774
  %v1776 = vsub.s32 4294967266, %v1771
  %v1777 = vadd.s32 %v1776, 127
  %v1778 = vshll.u32 %v1777, 23
  %v1779 = vor.u32 4788187, %v1778
  %v1780 = vand.u32 2147483647, %v1779
  %v1782 = vcvt.s32.f32 %v1775
  %v1783 = vmul.f32 %v1782, %v1780
  %v1784 = vxor.u32 %v1783, 2147483648
  %v1785 = vsel %vm1702, %v1784, %v1783
  %v1786 = vsub.s32 4, %v1762
  %v1787 = vsel %vm1702, %v1786, %v1762
  %v1788 = vsel %vm1701, %v236, %v1785
  %v1789 = vsel %vm1701, 0, %v1787
  %v1790 = vcosq.f32.pop %v1788
  %v1791 = vsinq.f32.pop %v1788
  %vm1792 = vweird.f32 %v236
  %v1793 = vadd.s32 %v1789, 3
  %v1794 = vand.u32 %v1793, 3
  %vm1795 = vcmp.lt.s32.totalorder %v1794, 2
  %vm1796 = vcmp.eq.s32.totalorder %v1794, 0
  %v1797 = vxor.u32 %v1791, 2147483648
  %v1798 = vsel %vm1796, %v1790, %v1797
  %vm1799 = vcmp.eq.s32.totalorder %v1794, 2
  %v1800 = vxor.u32 %v1790, 2147483648
  %v1801 = vsel %vm1799, %v1800, %v1791
  %v1802 = vsel %vm1795, %v1798, %v1801
  %v1803 = vsel %vm1792, nan, %v1802
  %v1804 = vand.u32 2147483647, %v241
  %vm1805 = vcmp.le.f32.partialorder %v1804, 0.7853982
  %vm1806 = vcmp.lt.s32.totalorder %v241, 0
  %v1807 = vand.u32 %v241, 2139095040
  %v1808 = vshrl.u32 %v1807, 23
  %v1809 = vsub.s32 %v1808, 127
  %v1810 = vand.u32 2147483647, %v241
  %v1811 = vand.u32 %v1810, 8388607
  %v1812 = vor.u32 %v1811, 8388608
  %v1813 = vsub.s32 0, %v1812
  %v1814 = vadd.s32 %v1809, 1
  %vm1815 = vcmp.gt.s32.totalorder %v1814, 0
  %v1816 = vsel %vm1815, %v1814, 0
  %v1817 = vshrl.u32 %v1816, 5
  %v1818 = vand.u32 %v1816, 31
  %v1819 = vsub.s32 32, %v1818
  %v1820 = vshrl.u32 683565275, %v1819
  %v1821 = vshll.u32 683565275, %v1818
  %v1822 = vshrl.u32 2475754826, %v1819
  %v1823 = vor.u32 %v1821, %v1822
  %v1824 = vshll.u32 2475754826, %v1818
  %v1825 = vshrl.u32 2131351028, %v1819
  %v1826 = vor.u32 %v1824, %v1825
  %v1827 = vshll.u32 2131351028, %v1818
  %v1828 = vshrl.u32 2102212464, %v1819
  %v1829 = vor.u32 %v1827, %v1828
  %v1830 = vshll.u32 2102212464, %v1818
  %v1831 = vshrl.u32 920167782, %v1819
  %v1832 = vor.u32 %v1830, %v1831
  %v1833 = vshll.u32 920167782, %v1818
  %v1834 = vshrl.u32 1326507024, %v1819
  %v1835 = vor.u32 %v1833, %v1834
  %vm1836 = vcmp.lt.s32.totalorder %v1817, 1
  %vm1837 = vcmp.lt.s32.totalorder %v1817, 2
  %vm1838 = vcmp.lt.s32.totalorder %v1817, 3
  %vm1839 = vcmp.lt.s32.totalorder %v1817, 4
  %v1840 = vsel %vm1836, %v1820, %v1823
  %v1841 = vsel %vm1839, %v1829, 2102212464
  %v1842 = vsel %vm1838, %v1826, %v1841
  %v1843 = vsel %vm1837, %v1840, %v1842
  %v1844 = vsel %vm1836, %v1823, %v1826
  %v1845 = vsel %vm1839, %v1832, 920167782
  %v1846 = vsel %vm1838, %v1829, %v1845
  %v1847 = vsel %vm1837, %v1844, %v1846
  %v1848 = vsel %vm1836, %v1826, %v1829
  %v1849 = vsel %vm1839, %v1835, 1326507024
  %v1850 = vsel %vm1838, %v1832, %v1849
  %v1851 = vsel %vm1837, %v1848, %v1850
  %v1852 = vshll.u32 %v1812, 8
  %v1853 = vmul.u32.u64.compose %v1852, %v1851
  %v1854 = vextract.low.u32 %v1853
  %v1855 = vextract.high.u32 %v1853
  %v1856 = vmul.u32.u64.compose %v1852, %v1847
  %v1857 = vextract.low.u32 %v1856
  %v1858 = vextract.high.u32 %v1856
  %v1859 = vmul.u32 %v1852, %v1843
  %v1860 = vadd.s32 %v1855, %v1857
  %vm1861 = vc.u32 %v1855, %v1857
  %v1862 = vadd.s32 %v1858, 1
  %v1863 = vsel %vm1861, %v1862, %v1858
  %v1864 = vadd.s32 %v1859, %v1863
  %v1865 = vadd.s32 %v1864, 536870912
  %v1866 = vshrl.u32 %v1865, 30
  %v1867 = vshll.u32 %v1866, 30
  %v1868 = vsub.s32 %v1864, %v1867
  %vm1869 = vcmp.lt.s32.totalorder %v1868, 0
  %v1870 = vsub.s32 0, %v1868
  %v1871 = vsel %vm1869, %v1870, %v1868
  %v1872 = vclz %v1871
  %v1873 = vsub.s32 %v1872, 2
  %vm1874 = vcmp.gt.s32.totalorder 0, %v1873
  %v1875 = vsel %vm1874, 0, %v1873
  %v1876 = vsub.s32 32, %v1875
  %v1877 = vshll.u32 %v1868, %v1875
  %v1878 = vshrl.u32 %v1860, %v1876
  %v1879 = vor.u32 %v1877, %v1878
  %v1880 = vsub.s32 4294967266, %v1875
  %v1881 = vadd.s32 %v1880, 127
  %v1882 = vshll.u32 %v1881, 23
  %v1883 = vor.u32 4788187, %v1882
  %v1884 = vand.u32 2147483647, %v1883
  %v1886 = vcvt.s32.f32 %v1879
  %v1887 = vmul.f32 %v1886, %v1884
  %v1888 = vxor.u32 %v1887, 2147483648
  %v1889 = vsel %vm1806, %v1888, %v1887
  %v1890 = vsub.s32 4, %v1866
  %v1891 = vsel %vm1806, %v1890, %v1866
  %v1892 = vsel %vm1805, %v241, %v1889
  %v1893 = vsel %vm1805, 0, %v1891
  %v1894 = vcosq.f32.pop %v1892
  %v1895 = vsinq.f32.pop %v1892
  %vm1896 = vweird.f32 %v241
  %v1897 = vadd.s32 %v1893, 3
  %v1898 = vand.u32 %v1897, 3
  %vm1899 = vcmp.lt.s32.totalorder %v1898, 2
  %vm1900 = vcmp.eq.s32.totalorder %v1898, 0
  %v1901 = vxor.u32 %v1895, 2147483648
  %v1902 = vsel %vm1900, %v1894, %v1901
  %vm1903 = vcmp.eq.s32.totalorder %v1898, 2
  %v1904 = vxor.u32 %v1894, 2147483648
  %v1905 = vsel %vm1903, %v1904, %v1895
  %v1906 = vsel %vm1899, %v1902, %v1905
  %v1907 = vsel %vm1896, nan, %v1906
  %1908 = vst [vmem:[%s2] sm:$0xff] %v347
  %1909 = vst [vmem:[%s2 + $0x8] sm:$0xff] %v451
  %1910 = vst [vmem:[%s2 + $0x10] sm:$0xff] %v555
  %1911 = vst [vmem:[%s2 + $0x18] sm:$0xff] %v659
  %1912 = vst [vmem:[%s2 + $0x20] sm:$0xff] %v763
  %1913 = vst [vmem:[%s2 + $0x28] sm:$0xff] %v867
  %1914 = vst [vmem:[%s2 + $0x30] sm:$0xff] %v971
  %1915 = vst [vmem:[%s2 + $0x38] sm:$0xff] %v1075
  %1916 = vst [vmem:[%s2 + $0x40] sm:$0xff] %v1179
  %1917 = vst [vmem:[%s2 + $0x48] sm:$0xff] %v1283
  %1918 = vst [vmem:[%s2 + $0x50] sm:$0xff] %v1387
  %1919 = vst [vmem:[%s2 + $0x58] sm:$0xff] %v1491
  %1920 = vst [vmem:[%s2 + $0x60] sm:$0xff] %v1595
  %1921 = vst [vmem:[%s2 + $0x68] sm:$0xff] %v1699
  %1922 = vst [vmem:[%s2 + $0x70] sm:$0xff] %v1803
  %1923 = vst [vmem:[%s2 + $0x78] sm:$0xff] %v1907
  // Predicated region
  $region10: #{sinusoid_encode.1} parent=0 // pred_check
    _
  $region11: #{sinusoid_encode.1} parent=0 // pred_check_branch
    %1925 = sbr.rel (0) target = $region13
  $region12: #{sinusoid_encode.1} parent=0 // pred_region
    _
  $region13: #{sinusoid_encode.1} parent=0 // pred_fallthru
    _
  // Predicated region
  $region14: #{sinusoid_encode.1} parent=0 // pred_check
    _
  $region15: #{sinusoid_encode.1} parent=0 // pred_check_branch
    %1927 = sbr.rel (0) target = $region17
  $region16: #{sinusoid_encode.1} parent=0 // pred_region
    _
  $region17: #{sinusoid_encode.1} parent=0 // pred_fallthru
    _

</llo_original>
